<compile_context>
chip_gen: v7x
topology: tpu7x:2x2x1
jax: 0.10.0
libtpu: 0.0.40
codegen_flags: <defaults>
</compile_context>

<pallas_src>
import functools
import math

import jax
import jax.numpy as jnp
from jax.experimental import pallas as pl
from jax.experimental.pallas import tpu as pltpu


def attention_kernel(x0_ref,     # (S, D)    f32  batch-0 activations
                     nmask_ref,  # (S, S)    f32  mask[0] * -1e9 (additive)
                     wqkv_ref,   # (D, 3D)   bf16 [Wq*scale | Wk | Wv]
                     bqkv_ref,   # (1, 3D)   f32  [bq*scale | bk | bv]
                     wd_ref,     # (D, D)    bf16 dense weight, pre-scaled by rw
                     bd_ref,     # (1, D)    f32  dense bias,   pre-scaled by rw
                     attn_ref,   # (S, D)    f32  output: rw * attention(x0)
                     qkv_scr,    # (3H, S, depth) f32 VMEM scratch (head split)
                     ctx_scr,    # (S, D)    f32 VMEM scratch (head re-pack)
                     *, num_heads):
    H = num_heads
    S, D = x0_ref.shape
    dp = D // H

    # Fused lane-dense QKV projection: one (S,D)@(D,3D) MXU matmul.
    # (1/sqrt(depth) already folded into the q columns/bias in the wrapper.)
    qkv = jnp.dot(x0_ref[...].astype(jnp.bfloat16), wqkv_ref[...],
                  preferred_element_type=jnp.float32) + bqkv_ref[...]   # (S, 3D)

    # Head split: static lane slices stored into a head-major scratch.
    # Column order of wqkv is [q_h0..q_h(H-1) | k_h0.. | v_h0..], depth wide each.
    for i in range(3 * H):
        qkv_scr[i] = qkv[:, i * dp:(i + 1) * dp]
    qkvh = qkv_scr[...]                                   # (3H, S, depth) f32
    q = qkvh[0:H].astype(jnp.bfloat16)                    # (H, S, depth)
    k = qkvh[H:2 * H].astype(jnp.bfloat16)
    v = qkvh[2 * H:3 * H].astype(jnp.bfloat16)

    # Scaled dot-product attention, batched over the leading head axis.
    logits = jnp.einsum("hqe,hke->hqk", q, k,
                        preferred_element_type=jnp.float32)             # (H,S,S)
    logits = logits + nmask_ref[...][None]                # additive mask (f32)
    m = jnp.max(logits, axis=-1, keepdims=True)
    e = jnp.exp(logits - m)
    p = e * pl.reciprocal(jnp.sum(e, axis=-1, keepdims=True), approx=True)
    ctx = jnp.einsum("hqk,hke->hqe", p.astype(jnp.bfloat16), v,
                     preferred_element_type=jnp.float32)                # (H,S,dp)

    # Re-pack heads onto lanes (same order as PyTorch's permute+reshape), then
    # one lane-dense K=D output projection (== fused sum of per-head matmuls).
    for h in range(H):
        ctx_scr[:, h * dp:(h + 1) * dp] = ctx[h]
    attn_ref[...] = jnp.dot(ctx_scr[...].astype(jnp.bfloat16), wd_ref[...],
                            preferred_element_type=jnp.float32) + bd_ref[...]


def ffn_residual_kernel(x_ref,     # (1, S, D) f32  this batch element
                        attn_ref,  # (S, D)    f32  rw-scaled attention residual
                        w1_ref,    # (D, DFF)  bf16
                        b1_ref,    # (1, DFF)  f32
                        w2_ref,    # (DFF, D)  bf16  pre-scaled by rw
                        b2_ref,    # (1, D)    f32   pre-scaled by rw
                        out_ref):  # (1, S, D) f32
    xb = x_ref[0]                                         # (S, D)
    out1 = xb + attn_ref[...]                             # residual 1 (attn[0] broadcast)
    h1 = jnp.maximum(
        jnp.dot(out1.astype(jnp.bfloat16), w1_ref[...],
                preferred_element_type=jnp.float32) + b1_ref[...], 0.0)
    ffn = jnp.dot(h1.astype(jnp.bfloat16), w2_ref[...],
                  preferred_element_type=jnp.float32) + b2_ref[...]
    out_ref[0] = out1 + ffn                               # residual 2 (rw folded into w2/b2)


def encoder_layer(x, mask, params, num_heads):
    B, S, D = x.shape
    H = num_heads
    dp = D // H
    DFF = params["w1"].shape[1]
    bf = jnp.bfloat16
    scale = 1.0 / math.sqrt(dp)
    rw = params["rw"][0]

    # --- wrapper-side layout plumbing / constant folding (free under jit) ----
    # Fused lane-dense QKV weight (D, 3D) with 1/sqrt(depth) folded into Wq, bq.
    wqkv = jnp.concatenate(
        [params["wq"] * scale, params["wk"], params["wv"]], axis=1).astype(bf)
    bqkv = jnp.concatenate(
        [params["bq"] * scale, params["bk"], params["bv"]], axis=1)      # f32
    # resweight folded into the dense projection and the second FFN matmul.
    wd = (params["wd"] * rw).astype(bf)
    bd = params["bd"] * rw
    w1 = params["w1"].astype(bf)
    w2 = (params["w2"] * rw).astype(bf)
    b2 = params["b2"] * rw

    x0 = x[0]                      # module quirk: only attn(batch 0) is used
    nmask = mask[0] * (-1e9)       # additive mask, premultiplied, batch 0 only

    vmem = pl.BlockSpec(memory_space=pltpu.MemorySpace.VMEM)

    cost1 = pl.CostEstimate(
        flops=int(2 * S * D * (3 * D) + 4 * H * S * S * dp + 2 * S * D * D),
        transcendentals=int(H * S * S),
        bytes_accessed=int(4 * S * D + 4 * S * S + 2 * D * 3 * D + 4 * 3 * D
                           + 2 * D * D + 4 * D + 4 * S * D))

    # Kernel 1: attention on batch 0 (grid-less; everything fits VMEM here).
    attn_scaled = pl.pallas_call(
        functools.partial(attention_kernel, num_heads=H),
        out_shape=jax.ShapeDtypeStruct((S, D), jnp.float32),
        in_specs=[vmem] * 6,
        out_specs=vmem,
        scratch_shapes=[pltpu.VMEM((3 * H, S, dp), jnp.float32),
                        pltpu.VMEM((S, D), jnp.float32)],
        compiler_params=pltpu.CompilerParams(vmem_limit_bytes=32 * 1024 * 1024),
        cost_estimate=cost1,
    )(x0, nmask, wqkv, bqkv, wd, bd)

    cost2 = pl.CostEstimate(
        flops=int(4 * B * S * D * DFF),
        transcendentals=0,
        bytes_accessed=int(8 * B * S * D + 4 * S * D + 2 * D * DFF + 4 * DFF
                           + 2 * DFF * D + 4 * D))

    # Kernel 2: residual + FFN, gridded over batch; weights pinned via constant
    # index maps (no re-DMA across consecutive identical blocks).
    out = pl.pallas_call(
        ffn_residual_kernel,
        out_shape=jax.ShapeDtypeStruct((B, S, D), jnp.float32),
        grid=(B,),
        in_specs=[
            pl.BlockSpec((1, S, D), lambda b: (b, 0, 0)),
            pl.BlockSpec((S, D), lambda b: (0, 0)),
            pl.BlockSpec((D, DFF), lambda b: (0, 0)),
            pl.BlockSpec((1, DFF), lambda b: (0, 0)),
            pl.BlockSpec((DFF, D), lambda b: (0, 0)),
            pl.BlockSpec((1, D), lambda b: (0, 0)),
        ],
        out_specs=pl.BlockSpec((1, S, D), lambda b: (b, 0, 0)),
        compiler_params=pltpu.CompilerParams(
            dimension_semantics=("parallel",),
            vmem_limit_bytes=32 * 1024 * 1024),
        cost_estimate=cost2,
    )(x, attn_scaled, w1, params["b1"], w2, b2)
    return out


def ref_forward(x, mask, p, num_heads):
    """Pure-JAX f32 reference mirroring the PyTorch module (eval mode)."""
    B, S, D = x.shape
    depth = D // num_heads

    def split(z):
        return z.reshape(B, S, num_heads, depth).transpose(0, 2, 1, 3)

    q = split(x @ p["wq"] + p["bq"])
    k = split(x @ p["wk"] + p["bk"])
    v = split(x @ p["wv"] + p["bv"])
    logits = jnp.einsum("bhqd,bhkd->bhqk", q, k) / math.sqrt(depth)
    logits = logits + mask[:, None, :, :] * (-1e9)
    w = jax.nn.softmax(logits, axis=-1)
    o = jnp.einsum("bhqk,bhkd->bhqd", w, v).transpose(0, 2, 1, 3).reshape(B, S, D)
    attn = o @ p["wd"] + p["bd"]
    rw = p["rw"][0]
    seq = attn[0] * rw                 # EncoderLayer uses batch element 0 only
    out1 = x + seq                     # broadcast over batch
    h1 = jnp.maximum(out1 @ p["w1"] + p["b1"], 0.0)
    ffn = h1 @ p["w2"] + p["b2"]
    return out1 + ffn * rw


if __name__ == "__main__":
    B, S, D, H, DFF = 2, 8, 32, 4, 64

    key = jax.random.PRNGKey(0)
    ks = jax.random.split(key, 16)
    init = lambda k, shape: jax.random.normal(k, shape, jnp.float32) * 0.05

    params = {
        "wq": init(ks[0], (D, D)),  "bq": init(ks[1], (1, D)),
        "wk": init(ks[2], (D, D)),  "bk": init(ks[3], (1, D)),
        "wv": init(ks[4], (D, D)),  "bv": init(ks[5], (1, D)),
        "wd": init(ks[6], (D, D)),  "bd": init(ks[7], (1, D)),
        "w1": init(ks[8], (D, DFF)), "b1": init(ks[9], (1, DFF)),
        "w2": init(ks[10], (DFF, D)), "b2": init(ks[11], (1, D)),
        # PyTorch __init__ sets resweight=0.0; use a nonzero deterministic value
        # so the attention/FFN paths are actually exercised by the check.
        "rw": jnp.array([0.3], jnp.float32),
    }

    x = jax.random.normal(ks[12], (B, S, D), jnp.float32)
    mask = (jax.random.uniform(ks[13], (B, S, S)) > 0.8).astype(jnp.float32)

    run = jax.jit(functools.partial(encoder_layer, num_heads=H))
    out = run(x, mask, params)
    jax.block_until_ready(out)

    ref = ref_forward(x, mask, params, H)
    # Tolerance covers bf16 matmul operands (f32 accumulate) and the approx
    # reciprocal in the softmax; mask/softmax/residual math stays in f32.
    if not jnp.allclose(out, ref, atol=2e-2, rtol=2e-2):
        raise AssertionError("Pallas kernel mismatch vs JAX reference")

    print("KERNEL_OK")
</pallas_src>

<mosaic_0001>
module attributes {stable_mosaic.version = 11 : i64} {
  func.func @ffn_residual_kernel(%arg0: i32, %arg1: memref<1x8x32xf32, #tpu.memory_space<vmem>>, %arg2: memref<8x32xf32, #tpu.memory_space<vmem>>, %arg3: memref<32x64xbf16, #tpu.memory_space<vmem>>, %arg4: memref<1x64xf32, #tpu.memory_space<vmem>>, %arg5: memref<64x32xbf16, #tpu.memory_space<vmem>>, %arg6: memref<1x32xf32, #tpu.memory_space<vmem>>, %arg7: memref<1x8x32xf32, #tpu.memory_space<vmem>>) attributes {dimension_semantics = [#tpu.dimension_semantics<parallel>], iteration_bounds = array<i64: 2>, scalar_prefetch = 0 : i64, scratch_operands = 0 : i64, tpu.core_type = #tpu.core_type<tc>, window_params = [{transform_indices = @transform_0, window_bounds = array<i64: 1, 8, 32>}, {pipeline_mode = #tpu.pipeline_mode<synchronous>, transform_indices = @transform_1, window_bounds = array<i64: 8, 32>}, {pipeline_mode = #tpu.pipeline_mode<synchronous>, transform_indices = @transform_2, window_bounds = array<i64: 32, 64>}, {pipeline_mode = #tpu.pipeline_mode<synchronous>, transform_indices = @transform_3, window_bounds = array<i64: 1, 64>}, {pipeline_mode = #tpu.pipeline_mode<synchronous>, transform_indices = @transform_4, window_bounds = array<i64: 64, 32>}, {pipeline_mode = #tpu.pipeline_mode<synchronous>, transform_indices = @transform_5, window_bounds = array<i64: 1, 32>}, {transform_indices = @transform_6, window_bounds = array<i64: 1, 8, 32>}]} {
    %c0 = arith.constant 0 : index
    %c0_0 = arith.constant 0 : index
    %c0_1 = arith.constant 0 : index
    %0 = vector.load %arg1[%c0, %c0_0, %c0_1] : memref<1x8x32xf32, #tpu.memory_space<vmem>>, vector<1x8x32xf32>
    %1 = vector.shape_cast %0 : vector<1x8x32xf32> to vector<8x32xf32>
    %c0_2 = arith.constant 0 : index
    %c0_3 = arith.constant 0 : index
    %2 = vector.load %arg2[%c0_2, %c0_3] : memref<8x32xf32, #tpu.memory_space<vmem>>, vector<8x32xf32>
    %3 = arith.addf %1, %2 : vector<8x32xf32>
    %4 = arith.truncf %3 : vector<8x32xf32> to vector<8x32xbf16>
    %c0_4 = arith.constant 0 : index
    %c0_5 = arith.constant 0 : index
    %5 = vector.load %arg3[%c0_4, %c0_5] : memref<32x64xbf16, #tpu.memory_space<vmem>>, vector<32x64xbf16>
    %cst = arith.constant dense<0.000000e+00> : vector<8x64xf32>
    %6 = tpu.matmul %4, %5, %cst {dimension_numbers = #tpu.dot_dimension_numbers<[1], [0], [0], [1], [0, 0, 1, 1], [], []>} : vector<8x32xbf16>, vector<32x64xbf16>, vector<8x64xf32> -> vector<8x64xf32>
    %c0_6 = arith.constant 0 : index
    %c0_7 = arith.constant 0 : index
    %7 = vector.load %arg4[%c0_6, %c0_7] : memref<1x64xf32, #tpu.memory_space<vmem>>, vector<1x64xf32>
    %8 = vector.broadcast %7 : vector<1x64xf32> to vector<8x64xf32>
    %9 = arith.addf %6, %8 : vector<8x64xf32>
    %cst_8 = arith.constant 0.000000e+00 : f32
    %10 = vector.broadcast %cst_8 : f32 to vector<8x64xf32>
    %11 = arith.maximumf %9, %10 : vector<8x64xf32>
    %12 = arith.truncf %11 : vector<8x64xf32> to vector<8x64xbf16>
    %c0_9 = arith.constant 0 : index
    %c0_10 = arith.constant 0 : index
    %13 = vector.load %arg5[%c0_9, %c0_10] : memref<64x32xbf16, #tpu.memory_space<vmem>>, vector<64x32xbf16>
    %cst_11 = arith.constant dense<0.000000e+00> : vector<8x32xf32>
    %14 = tpu.matmul %12, %13, %cst_11 {dimension_numbers = #tpu.dot_dimension_numbers<[1], [0], [0], [1], [0, 0, 1, 1], [], []>} : vector<8x64xbf16>, vector<64x32xbf16>, vector<8x32xf32> -> vector<8x32xf32>
    %c0_12 = arith.constant 0 : index
    %c0_13 = arith.constant 0 : index
    %15 = vector.load %arg6[%c0_12, %c0_13] : memref<1x32xf32, #tpu.memory_space<vmem>>, vector<1x32xf32>
    %16 = vector.broadcast %15 : vector<1x32xf32> to vector<8x32xf32>
    %17 = arith.addf %14, %16 : vector<8x32xf32>
    %18 = arith.addf %3, %17 : vector<8x32xf32>
    %c0_14 = arith.constant 0 : index
    %c0_15 = arith.constant 0 : index
    %c0_16 = arith.constant 0 : index
    %19 = vector.load %arg7[%c0_14, %c0_15, %c0_16] : memref<1x8x32xf32, #tpu.memory_space<vmem>>, vector<1x8x32xf32>
    %20 = vector.shape_cast %19 : vector<1x8x32xf32> to vector<8x32xf32>
    %21 = vector.shape_cast %18 : vector<8x32xf32> to vector<1x8x32xf32>
    tpu.vector_store %arg7[%c0_14, %c0_15, %c0_16], %21 {strides = array<i32>} : memref<1x8x32xf32, #tpu.memory_space<vmem>>, vector<1x8x32xf32>,
    return
  }
  func.func @transform_0(%arg0: i32) -> (i32, i32, i32) {
    %c0_i32 = arith.constant 0 : i32
    %c0_i32_0 = arith.constant 0 : i32
    %c0_i32_1 = arith.constant 0 : i32
    return %arg0, %c0_i32, %c0_i32_0 : i32, i32, i32
  }
  func.func @transform_1(%arg0: i32) -> (i32, i32) {
    %c0_i32 = arith.constant 0 : i32
    %c0_i32_0 = arith.constant 0 : i32
    %c0_i32_1 = arith.constant 0 : i32
    return %c0_i32, %c0_i32_0 : i32, i32
  }
  func.func @transform_2(%arg0: i32) -> (i32, i32) {
    %c0_i32 = arith.constant 0 : i32
    %c0_i32_0 = arith.constant 0 : i32
    %c0_i32_1 = arith.constant 0 : i32
    return %c0_i32, %c0_i32_0 : i32, i32
  }
  func.func @transform_3(%arg0: i32) -> (i32, i32) {
    %c0_i32 = arith.constant 0 : i32
    %c0_i32_0 = arith.constant 0 : i32
    %c0_i32_1 = arith.constant 0 : i32
    return %c0_i32, %c0_i32_0 : i32, i32
  }
  func.func @transform_4(%arg0: i32) -> (i32, i32) {
    %c0_i32 = arith.constant 0 : i32
    %c0_i32_0 = arith.constant 0 : i32
    %c0_i32_1 = arith.constant 0 : i32
    return %c0_i32, %c0_i32_0 : i32, i32
  }
  func.func @transform_5(%arg0: i32) -> (i32, i32) {
    %c0_i32 = arith.constant 0 : i32
    %c0_i32_0 = arith.constant 0 : i32
    %c0_i32_1 = arith.constant 0 : i32
    return %c0_i32, %c0_i32_0 : i32, i32
  }
  func.func @transform_6(%arg0: i32) -> (i32, i32, i32) {
    %c0_i32 = arith.constant 0 : i32
    %c0_i32_0 = arith.constant 0 : i32
    %c0_i32_1 = arith.constant 0 : i32
    return %arg0, %c0_i32, %c0_i32_0 : i32, i32, i32
  }
}

module attributes {stable_mosaic.version = 11 : i64} {
  func.func @attention_kernel(%arg0: memref<8x32xf32, #tpu.memory_space<vmem>>, %arg1: memref<8x8xf32, #tpu.memory_space<vmem>>, %arg2: memref<32x96xbf16, #tpu.memory_space<vmem>>, %arg3: memref<1x96xf32, #tpu.memory_space<vmem>>, %arg4: memref<32x32xbf16, #tpu.memory_space<vmem>>, %arg5: memref<1x32xf32, #tpu.memory_space<vmem>>, %arg6: memref<8x32xf32, #tpu.memory_space<vmem>>, %arg7: memref<12x8x8xf32, #tpu.memory_space<vmem>>, %arg8: memref<8x32xf32, #tpu.memory_space<vmem>>) attributes {dimension_semantics = [], scalar_prefetch = 0 : i64, scratch_operands = 2 : i64, tpu.core_type = #tpu.core_type<tc>} {
    %c0 = arith.constant 0 : index
    %c0_0 = arith.constant 0 : index
    %0 = vector.load %arg0[%c0, %c0_0] : memref<8x32xf32, #tpu.memory_space<vmem>>, vector<8x32xf32>
    %1 = arith.truncf %0 : vector<8x32xf32> to vector<8x32xbf16>
    %c0_1 = arith.constant 0 : index
    %c0_2 = arith.constant 0 : index
    %2 = vector.load %arg2[%c0_1, %c0_2] : memref<32x96xbf16, #tpu.memory_space<vmem>>, vector<32x96xbf16>
    %cst = arith.constant dense<0.000000e+00> : vector<8x96xf32>
    %3 = tpu.matmul %1, %2, %cst {dimension_numbers = #tpu.dot_dimension_numbers<[1], [0], [0], [1], [0, 0, 1, 1], [], []>} : vector<8x32xbf16>, vector<32x96xbf16>, vector<8x96xf32> -> vector<8x96xf32>
    %c0_3 = arith.constant 0 : index
    %c0_4 = arith.constant 0 : index
    %4 = vector.load %arg3[%c0_3, %c0_4] : memref<1x96xf32, #tpu.memory_space<vmem>>, vector<1x96xf32>
    %5 = vector.broadcast %4 : vector<1x96xf32> to vector<8x96xf32>
    %6 = arith.addf %3, %5 : vector<8x96xf32>
    %7 = vector.extract_strided_slice %6 {offsets = [0, 0], sizes = [8, 8], strides = [1, 1]} : vector<8x96xf32> to vector<8x8xf32>
    %c0_5 = arith.constant 0 : index
    %c0_6 = arith.constant 0 : index
    %c0_7 = arith.constant 0 : index
    %8 = vector.load %arg7[%c0_5, %c0_6, %c0_7] : memref<12x8x8xf32, #tpu.memory_space<vmem>>, vector<1x8x8xf32>
    %9 = vector.shape_cast %8 : vector<1x8x8xf32> to vector<8x8xf32>
    %10 = vector.shape_cast %7 : vector<8x8xf32> to vector<1x8x8xf32>
    tpu.vector_store %arg7[%c0_5, %c0_6, %c0_7], %10 {strides = array<i32>} : memref<12x8x8xf32, #tpu.memory_space<vmem>>, vector<1x8x8xf32>,
    %11 = vector.extract_strided_slice %6 {offsets = [0, 8], sizes = [8, 8], strides = [1, 1]} : vector<8x96xf32> to vector<8x8xf32>
    %c1 = arith.constant 1 : index
    %c0_8 = arith.constant 0 : index
    %c0_9 = arith.constant 0 : index
    %12 = vector.load %arg7[%c1, %c0_8, %c0_9] : memref<12x8x8xf32, #tpu.memory_space<vmem>>, vector<1x8x8xf32>
    %13 = vector.shape_cast %12 : vector<1x8x8xf32> to vector<8x8xf32>
    %14 = vector.shape_cast %11 : vector<8x8xf32> to vector<1x8x8xf32>
    tpu.vector_store %arg7[%c1, %c0_8, %c0_9], %14 {strides = array<i32>} : memref<12x8x8xf32, #tpu.memory_space<vmem>>, vector<1x8x8xf32>,
    %15 = vector.extract_strided_slice %6 {offsets = [0, 16], sizes = [8, 8], strides = [1, 1]} : vector<8x96xf32> to vector<8x8xf32>
    %c2 = arith.constant 2 : index
    %c0_10 = arith.constant 0 : index
    %c0_11 = arith.constant 0 : index
    %16 = vector.load %arg7[%c2, %c0_10, %c0_11] : memref<12x8x8xf32, #tpu.memory_space<vmem>>, vector<1x8x8xf32>
    %17 = vector.shape_cast %16 : vector<1x8x8xf32> to vector<8x8xf32>
    %18 = vector.shape_cast %15 : vector<8x8xf32> to vector<1x8x8xf32>
    tpu.vector_store %arg7[%c2, %c0_10, %c0_11], %18 {strides = array<i32>} : memref<12x8x8xf32, #tpu.memory_space<vmem>>, vector<1x8x8xf32>,
    %19 = vector.extract_strided_slice %6 {offsets = [0, 24], sizes = [8, 8], strides = [1, 1]} : vector<8x96xf32> to vector<8x8xf32>
    %c3 = arith.constant 3 : index
    %c0_12 = arith.constant 0 : index
    %c0_13 = arith.constant 0 : index
    %20 = vector.load %arg7[%c3, %c0_12, %c0_13] : memref<12x8x8xf32, #tpu.memory_space<vmem>>, vector<1x8x8xf32>
    %21 = vector.shape_cast %20 : vector<1x8x8xf32> to vector<8x8xf32>
    %22 = vector.shape_cast %19 : vector<8x8xf32> to vector<1x8x8xf32>
    tpu.vector_store %arg7[%c3, %c0_12, %c0_13], %22 {strides = array<i32>} : memref<12x8x8xf32, #tpu.memory_space<vmem>>, vector<1x8x8xf32>,
    %23 = vector.extract_strided_slice %6 {offsets = [0, 32], sizes = [8, 8], strides = [1, 1]} : vector<8x96xf32> to vector<8x8xf32>
    %c4 = arith.constant 4 : index
    %c0_14 = arith.constant 0 : index
    %c0_15 = arith.constant 0 : index
    %24 = vector.load %arg7[%c4, %c0_14, %c0_15] : memref<12x8x8xf32, #tpu.memory_space<vmem>>, vector<1x8x8xf32>
    %25 = vector.shape_cast %24 : vector<1x8x8xf32> to vector<8x8xf32>
    %26 = vector.shape_cast %23 : vector<8x8xf32> to vector<1x8x8xf32>
    tpu.vector_store %arg7[%c4, %c0_14, %c0_15], %26 {strides = array<i32>} : memref<12x8x8xf32, #tpu.memory_space<vmem>>, vector<1x8x8xf32>,
    %27 = vector.extract_strided_slice %6 {offsets = [0, 40], sizes = [8, 8], strides = [1, 1]} : vector<8x96xf32> to vector<8x8xf32>
    %c5 = arith.constant 5 : index
    %c0_16 = arith.constant 0 : index
    %c0_17 = arith.constant 0 : index
    %28 = vector.load %arg7[%c5, %c0_16, %c0_17] : memref<12x8x8xf32, #tpu.memory_space<vmem>>, vector<1x8x8xf32>
    %29 = vector.shape_cast %28 : vector<1x8x8xf32> to vector<8x8xf32>
    %30 = vector.shape_cast %27 : vector<8x8xf32> to vector<1x8x8xf32>
    tpu.vector_store %arg7[%c5, %c0_16, %c0_17], %30 {strides = array<i32>} : memref<12x8x8xf32, #tpu.memory_space<vmem>>, vector<1x8x8xf32>,
    %31 = vector.extract_strided_slice %6 {offsets = [0, 48], sizes = [8, 8], strides = [1, 1]} : vector<8x96xf32> to vector<8x8xf32>
    %c6 = arith.constant 6 : index
    %c0_18 = arith.constant 0 : index
    %c0_19 = arith.constant 0 : index
    %32 = vector.load %arg7[%c6, %c0_18, %c0_19] : memref<12x8x8xf32, #tpu.memory_space<vmem>>, vector<1x8x8xf32>
    %33 = vector.shape_cast %32 : vector<1x8x8xf32> to vector<8x8xf32>
    %34 = vector.shape_cast %31 : vector<8x8xf32> to vector<1x8x8xf32>
    tpu.vector_store %arg7[%c6, %c0_18, %c0_19], %34 {strides = array<i32>} : memref<12x8x8xf32, #tpu.memory_space<vmem>>, vector<1x8x8xf32>,
    %35 = vector.extract_strided_slice %6 {offsets = [0, 56], sizes = [8, 8], strides = [1, 1]} : vector<8x96xf32> to vector<8x8xf32>
    %c7 = arith.constant 7 : index
    %c0_20 = arith.constant 0 : index
    %c0_21 = arith.constant 0 : index
    %36 = vector.load %arg7[%c7, %c0_20, %c0_21] : memref<12x8x8xf32, #tpu.memory_space<vmem>>, vector<1x8x8xf32>
    %37 = vector.shape_cast %36 : vector<1x8x8xf32> to vector<8x8xf32>
    %38 = vector.shape_cast %35 : vector<8x8xf32> to vector<1x8x8xf32>
    tpu.vector_store %arg7[%c7, %c0_20, %c0_21], %38 {strides = array<i32>} : memref<12x8x8xf32, #tpu.memory_space<vmem>>, vector<1x8x8xf32>,
    %39 = vector.extract_strided_slice %6 {offsets = [0, 64], sizes = [8, 8], strides = [1, 1]} : vector<8x96xf32> to vector<8x8xf32>
    %c8 = arith.constant 8 : index
    %c0_22 = arith.constant 0 : index
    %c0_23 = arith.constant 0 : index
    %40 = vector.load %arg7[%c8, %c0_22, %c0_23] : memref<12x8x8xf32, #tpu.memory_space<vmem>>, vector<1x8x8xf32>
    %41 = vector.shape_cast %40 : vector<1x8x8xf32> to vector<8x8xf32>
    %42 = vector.shape_cast %39 : vector<8x8xf32> to vector<1x8x8xf32>
    tpu.vector_store %arg7[%c8, %c0_22, %c0_23], %42 {strides = array<i32>} : memref<12x8x8xf32, #tpu.memory_space<vmem>>, vector<1x8x8xf32>,
    %43 = vector.extract_strided_slice %6 {offsets = [0, 72], sizes = [8, 8], strides = [1, 1]} : vector<8x96xf32> to vector<8x8xf32>
    %c9 = arith.constant 9 : index
    %c0_24 = arith.constant 0 : index
    %c0_25 = arith.constant 0 : index
    %44 = vector.load %arg7[%c9, %c0_24, %c0_25] : memref<12x8x8xf32, #tpu.memory_space<vmem>>, vector<1x8x8xf32>
    %45 = vector.shape_cast %44 : vector<1x8x8xf32> to vector<8x8xf32>
    %46 = vector.shape_cast %43 : vector<8x8xf32> to vector<1x8x8xf32>
    tpu.vector_store %arg7[%c9, %c0_24, %c0_25], %46 {strides = array<i32>} : memref<12x8x8xf32, #tpu.memory_space<vmem>>, vector<1x8x8xf32>,
    %47 = vector.extract_strided_slice %6 {offsets = [0, 80], sizes = [8, 8], strides = [1, 1]} : vector<8x96xf32> to vector<8x8xf32>
    %c10 = arith.constant 10 : index
    %c0_26 = arith.constant 0 : index
    %c0_27 = arith.constant 0 : index
    %48 = vector.load %arg7[%c10, %c0_26, %c0_27] : memref<12x8x8xf32, #tpu.memory_space<vmem>>, vector<1x8x8xf32>
    %49 = vector.shape_cast %48 : vector<1x8x8xf32> to vector<8x8xf32>
    %50 = vector.shape_cast %47 : vector<8x8xf32> to vector<1x8x8xf32>
    tpu.vector_store %arg7[%c10, %c0_26, %c0_27], %50 {strides = array<i32>} : memref<12x8x8xf32, #tpu.memory_space<vmem>>, vector<1x8x8xf32>,
    %51 = vector.extract_strided_slice %6 {offsets = [0, 88], sizes = [8, 8], strides = [1, 1]} : vector<8x96xf32> to vector<8x8xf32>
    %c11 = arith.constant 11 : index
    %c0_28 = arith.constant 0 : index
    %c0_29 = arith.constant 0 : index
    %52 = vector.load %arg7[%c11, %c0_28, %c0_29] : memref<12x8x8xf32, #tpu.memory_space<vmem>>, vector<1x8x8xf32>
    %53 = vector.shape_cast %52 : vector<1x8x8xf32> to vector<8x8xf32>
    %54 = vector.shape_cast %51 : vector<8x8xf32> to vector<1x8x8xf32>
    tpu.vector_store %arg7[%c11, %c0_28, %c0_29], %54 {strides = array<i32>} : memref<12x8x8xf32, #tpu.memory_space<vmem>>, vector<1x8x8xf32>,
    %c0_30 = arith.constant 0 : index
    %c0_31 = arith.constant 0 : index
    %c0_32 = arith.constant 0 : index
    %55 = vector.load %arg7[%c0_30, %c0_31, %c0_32] : memref<12x8x8xf32, #tpu.memory_space<vmem>>, vector<12x8x8xf32>
    %56 = vector.extract_strided_slice %55 {offsets = [0, 0, 0], sizes = [4, 8, 8], strides = [1, 1, 1]} : vector<12x8x8xf32> to vector<4x8x8xf32>
    %57 = arith.truncf %56 : vector<4x8x8xf32> to vector<4x8x8xbf16>
    %58 = vector.extract_strided_slice %55 {offsets = [4, 0, 0], sizes = [4, 8, 8], strides = [1, 1, 1]} : vector<12x8x8xf32> to vector<4x8x8xf32>
    %59 = arith.truncf %58 : vector<4x8x8xf32> to vector<4x8x8xbf16>
    %60 = vector.extract_strided_slice %55 {offsets = [8, 0, 0], sizes = [4, 8, 8], strides = [1, 1, 1]} : vector<12x8x8xf32> to vector<4x8x8xf32>
    %61 = arith.truncf %60 : vector<4x8x8xf32> to vector<4x8x8xbf16>
    "tpu.trace_start"() <{level = 10 : i32, message = "hqe,hke->hqk"}> : () -> ()
    %cst_33 = arith.constant dense<0.000000e+00> : vector<4x8x8xf32>
    %62 = tpu.matmul %57, %59, %cst_33 {dimension_numbers = #tpu.dot_dimension_numbers<[2], [2], [1], [1], [0, 0, 0, 1, 1, 1], [0], [0]>} : vector<4x8x8xbf16>, vector<4x8x8xbf16>, vector<4x8x8xf32> -> vector<4x8x8xf32>
    "tpu.trace_stop"() : () -> ()
    %c0_34 = arith.constant 0 : index
    %c0_35 = arith.constant 0 : index
    %63 = vector.load %arg1[%c0_34, %c0_35] : memref<8x8xf32, #tpu.memory_space<vmem>>, vector<8x8xf32>
    %64 = vector.shape_cast %63 : vector<8x8xf32> to vector<1x8x8xf32>
    %65 = vector.broadcast %64 : vector<1x8x8xf32> to vector<4x8x8xf32>
    %66 = arith.addf %62, %65 : vector<4x8x8xf32>
    %cst_36 = arith.constant dense<0xFF800000> : vector<4x8xf32>
    %67 = vector.multi_reduction <maximumf>, %66, %cst_36 [2] : vector<4x8x8xf32> to vector<4x8xf32>
    %68 = vector.shape_cast %67 : vector<4x8xf32> to vector<4x8x1xf32>
    %69 = vector.broadcast %68 : vector<4x8x1xf32> to vector<4x8x8xf32>
    %70 = arith.subf %66, %69 : vector<4x8x8xf32>
    %71 = math.exp %70 : vector<4x8x8xf32>
    %cst_37 = arith.constant dense<0.000000e+00> : vector<4x8xf32>
    %72 = vector.multi_reduction <add>, %71, %cst_37 [2] : vector<4x8x8xf32> to vector<4x8xf32>
    %73 = vector.shape_cast %72 : vector<4x8xf32> to vector<4x8x1xf32>
    %74 = tpu.reciprocal %73 {approx = true} : vector<4x8x1xf32> -> vector<4x8x1xf32>
    %75 = vector.broadcast %74 : vector<4x8x1xf32> to vector<4x8x8xf32>
    %76 = arith.mulf %71, %75 : vector<4x8x8xf32>
    %77 = arith.truncf %76 : vector<4x8x8xf32> to vector<4x8x8xbf16>
    "tpu.trace_start"() <{level = 10 : i32, message = "hqk,hke->hqe"}> : () -> ()
    %cst_38 = arith.constant dense<0.000000e+00> : vector<4x8x8xf32>
    %78 = tpu.matmul %77, %61, %cst_38 {dimension_numbers = #tpu.dot_dimension_numbers<[2], [1], [1], [2], [0, 0, 0, 1, 1, 2], [0], [0]>} : vector<4x8x8xbf16>, vector<4x8x8xbf16>, vector<4x8x8xf32> -> vector<4x8x8xf32>
    "tpu.trace_stop"() : () -> ()
    %79 = vector.extract_strided_slice %78 {offsets = [0, 0, 0], sizes = [1, 8, 8], strides = [1, 1, 1]} : vector<4x8x8xf32> to vector<1x8x8xf32>
    %80 = vector.shape_cast %79 : vector<1x8x8xf32> to vector<8x8xf32>
    %c0_39 = arith.constant 0 : index
    %c0_40 = arith.constant 0 : index
    %81 = vector.load %arg8[%c0_39, %c0_40] : memref<8x32xf32, #tpu.memory_space<vmem>>, vector<8x8xf32>
    tpu.vector_store %arg8[%c0_39, %c0_40], %80 {strides = array<i32>} : memref<8x32xf32, #tpu.memory_space<vmem>>, vector<8x8xf32>,
    %82 = vector.extract_strided_slice %78 {offsets = [1, 0, 0], sizes = [1, 8, 8], strides = [1, 1, 1]} : vector<4x8x8xf32> to vector<1x8x8xf32>
    %83 = vector.shape_cast %82 : vector<1x8x8xf32> to vector<8x8xf32>
    %c0_41 = arith.constant 0 : index
    %c8_42 = arith.constant 8 : index
    %84 = vector.load %arg8[%c0_41, %c8_42] : memref<8x32xf32, #tpu.memory_space<vmem>>, vector<8x8xf32>
    tpu.vector_store %arg8[%c0_41, %c8_42], %83 {strides = array<i32>} : memref<8x32xf32, #tpu.memory_space<vmem>>, vector<8x8xf32>,
    %85 = vector.extract_strided_slice %78 {offsets = [2, 0, 0], sizes = [1, 8, 8], strides = [1, 1, 1]} : vector<4x8x8xf32> to vector<1x8x8xf32>
    %86 = vector.shape_cast %85 : vector<1x8x8xf32> to vector<8x8xf32>
    %c0_43 = arith.constant 0 : index
    %c16 = arith.constant 16 : index
    %87 = vector.load %arg8[%c0_43, %c16] : memref<8x32xf32, #tpu.memory_space<vmem>>, vector<8x8xf32>
    tpu.vector_store %arg8[%c0_43, %c16], %86 {strides = array<i32>} : memref<8x32xf32, #tpu.memory_space<vmem>>, vector<8x8xf32>,
    %88 = vector.extract_strided_slice %78 {offsets = [3, 0, 0], sizes = [1, 8, 8], strides = [1, 1, 1]} : vector<4x8x8xf32> to vector<1x8x8xf32>
    %89 = vector.shape_cast %88 : vector<1x8x8xf32> to vector<8x8xf32>
    %c0_44 = arith.constant 0 : index
    %c24 = arith.constant 24 : index
    %90 = vector.load %arg8[%c0_44, %c24] : memref<8x32xf32, #tpu.memory_space<vmem>>, vector<8x8xf32>
    tpu.vector_store %arg8[%c0_44, %c24], %89 {strides = array<i32>} : memref<8x32xf32, #tpu.memory_space<vmem>>, vector<8x8xf32>,
    %c0_45 = arith.constant 0 : index
    %c0_46 = arith.constant 0 : index
    %91 = vector.load %arg8[%c0_45, %c0_46] : memref<8x32xf32, #tpu.memory_space<vmem>>, vector<8x32xf32>
    %92 = arith.truncf %91 : vector<8x32xf32> to vector<8x32xbf16>
    %c0_47 = arith.constant 0 : index
    %c0_48 = arith.constant 0 : index
    %93 = vector.load %arg4[%c0_47, %c0_48] : memref<32x32xbf16, #tpu.memory_space<vmem>>, vector<32x32xbf16>
    %cst_49 = arith.constant dense<0.000000e+00> : vector<8x32xf32>
    %94 = tpu.matmul %92, %93, %cst_49 {dimension_numbers = #tpu.dot_dimension_numbers<[1], [0], [0], [1], [0, 0, 1, 1], [], []>} : vector<8x32xbf16>, vector<32x32xbf16>, vector<8x32xf32> -> vector<8x32xf32>
    %c0_50 = arith.constant 0 : index
    %c0_51 = arith.constant 0 : index
    %95 = vector.load %arg5[%c0_50, %c0_51] : memref<1x32xf32, #tpu.memory_space<vmem>>, vector<1x32xf32>
    %96 = vector.broadcast %95 : vector<1x32xf32> to vector<8x32xf32>
    %97 = arith.addf %94, %96 : vector<8x32xf32>
    %c0_52 = arith.constant 0 : index
    %c0_53 = arith.constant 0 : index
    %98 = vector.load %arg6[%c0_52, %c0_53] : memref<8x32xf32, #tpu.memory_space<vmem>>, vector<8x32xf32>
    tpu.vector_store %arg6[%c0_52, %c0_53], %97 {strides = array<i32>} : memref<8x32xf32, #tpu.memory_space<vmem>>, vector<8x32xf32>,
    return
  }
}

</mosaic_0001>

<llo_original>
// kernel: encoder_layer.3
$region0: #{encoder_layer.3}
  #allocation0 [shape = 'u32[]', space=smem, size = 0x4, offset = 0x4, fixed_abs, tag = 'smem constant byte address 0x4 - core index']
  #allocation1 [shape = 'u32[144,128]{1,0:T(1,128)}', space=vmem, size = 0x12000, scoped, tag = 'internal scratch']
  %s0 = inlined_call_operand.vmem [shape: f32[2,8,32], index: 0, kind: input, shape index: {}]
  %s1 = inlined_call_operand.vmem [shape: f32[8,32], index: 1, kind: input, shape index: {}]
  %s2 = inlined_call_operand.vmem [shape: bf16[32,64], index: 2, kind: input, shape index: {}]
  %s3 = inlined_call_operand.vmem [shape: f32[1,64], index: 3, kind: input, shape index: {}]
  %s4 = inlined_call_operand.vmem [shape: bf16[64,32], index: 4, kind: input, shape index: {}]
  %s5 = inlined_call_operand.vmem [shape: f32[1,32], index: 5, kind: input, shape index: {}]
  %s6 = inlined_call_operand.hbm [shape: f32[2,8,32], index: 6, kind: output, shape index: {}]
  %s7 = sld [smem:[#allocation0]]
  $region57: #{encoder_layer.3} parent=0
    _
  %s9 = ssub.s32 1, %s7
  %s10 = scalar_select 0, %s9, %s7
  $region1: #{encoder_layer.3} parent=0
    #allocation2 [shape = 'u8[8192]{0}', space=vmem, size = 0x2000, scoped, tag = 'output window, operand 0']
    #allocation3 [shape = 's32[2]{0}', space=sflag, size = 0x8, scoped, tag = 'scoped memory for encoder_layer.3']
    %11 = vsyncpa [#allocation3], 0
    %s12 = scalar_lea.sflag [#allocation3], 1
    %13 = vsyncpa %s12, 0
    loop: start=0, step=1, limit=4
    $region2: #{encoder_layer.3} parent=1 // loop_pre_header
      _
    $region3: #{encoder_layer.3} parent=1 // loop_header
      %s15 = sphi 0, %s19
      %p16 = scmp.ge.s32.totalorder %s15, 4
      %s25 = sphi 0, %s27
      %s28 = sphi 0, %s25
      %s29 = sphi 0, %s28
      %s45 = sphi 0, %s29
      %s49 = sphi 0, %s49
      %s51 = sphi 0, %s49
      %s52 = sphi 0, %s51
      %s66 = sphi 0, %s52
      %s70 = sphi 0, %s70
      %s72 = sphi 0, %s70
      %s73 = sphi 0, %s72
      %s87 = sphi 0, %s73
      %s91 = sphi 0, %s91
      %s93 = sphi 0, %s91
      %s94 = sphi 0, %s93
      %s108 = sphi 0, %s94
      %s112 = sphi 0, %s112
      %s114 = sphi 0, %s112
      %s115 = sphi 0, %s114
      %s129 = sphi 0, %s115
      %s133 = sphi 0, %s133
      %s135 = sphi 0, %s133
      %s136 = sphi 0, %s135
      %s150 = sphi 0, %s136
      %s156 = sphi 0, %s158
      %s159 = sphi 0, %s156
      %s160 = sphi 0, %s159
      %s176 = sphi 0, %s160
    $region4: #{encoder_layer.3} parent=1 // loop_header_branch
      %18 = sbr.rel (%p16) target = $region8
    $region5: #{encoder_layer.3} parent=1 // loop_body
      %s20 = ssub.s32 %s15, 1
      %s21 = ssub.s32 %s15, 2
      %s22 = sadd.s32 %s15, 1
      %s23 = ssub.s32 %s15, %s22
      %p24 = scmp.eq.s32.totalorder %s23, 0
      %s26 = sadd.s32 %s25, 1
      %s27 = scalar_select %p24, %s25, %s26
      %p30 = pneg %p24
      %p31 = scmp.eq.s32.totalorder %s15, 1
      %p32 = por %p30, %p31
      %p33 = scmp.ne.s32.totalorder %s25, %s28
      %p34 = scmp.eq.s32.totalorder %s15, 0
      %p35 = por %p33, %p34
      %p36 = scmp.ne.s32.totalorder %s25, %s28
      %p37 = scmp.eq.s32.totalorder %s20, 1
      %p38 = por %p36, %p37
      %p39 = scmp.ne.s32.totalorder %s28, %s29
      %p40 = scmp.eq.s32.totalorder %s20, 0
      %p41 = por %p39, %p40
      %p42 = scmp.ne.s32.totalorder %s28, %s29
      %p43 = scmp.eq.s32.totalorder %s21, 1
      %p44 = por %p42, %p43
      %p46 = scmp.ne.s32.totalorder %s29, %s45
      %p47 = scmp.eq.s32.totalorder %s21, 0
      %p48 = por %p46, %p47
      %s50 = sadd.s32 %s49, 1
      %p53 = scmp.eq.s32.totalorder %s15, 1
      %p54 = scmp.ne.s32.totalorder %s49, %s51
      %p55 = scmp.eq.s32.totalorder %s15, 0
      %p56 = por %p54, %p55
      %p57 = scmp.ne.s32.totalorder %s49, %s51
      %p58 = scmp.eq.s32.totalorder %s20, 1
      %p59 = por %p57, %p58
      %p60 = scmp.ne.s32.totalorder %s51, %s52
      %p61 = scmp.eq.s32.totalorder %s20, 0
      %p62 = por %p60, %p61
      %p63 = scmp.ne.s32.totalorder %s51, %s52
      %p64 = scmp.eq.s32.totalorder %s21, 1
      %p65 = por %p63, %p64
      %p67 = scmp.ne.s32.totalorder %s52, %s66
      %p68 = scmp.eq.s32.totalorder %s21, 0
      %p69 = por %p67, %p68
      %s71 = sadd.s32 %s70, 1
      %p74 = scmp.eq.s32.totalorder %s15, 1
      %p75 = scmp.ne.s32.totalorder %s70, %s72
      %p76 = scmp.eq.s32.totalorder %s15, 0
      %p77 = por %p75, %p76
      %p78 = scmp.ne.s32.totalorder %s70, %s72
      %p79 = scmp.eq.s32.totalorder %s20, 1
      %p80 = por %p78, %p79
      %p81 = scmp.ne.s32.totalorder %s72, %s73
      %p82 = scmp.eq.s32.totalorder %s20, 0
      %p83 = por %p81, %p82
      %p84 = scmp.ne.s32.totalorder %s72, %s73
      %p85 = scmp.eq.s32.totalorder %s21, 1
      %p86 = por %p84, %p85
      %p88 = scmp.ne.s32.totalorder %s73, %s87
      %p89 = scmp.eq.s32.totalorder %s21, 0
      %p90 = por %p88, %p89
      %s92 = sadd.s32 %s91, 1
      %p95 = scmp.eq.s32.totalorder %s15, 1
      %p96 = scmp.ne.s32.totalorder %s91, %s93
      %p97 = scmp.eq.s32.totalorder %s15, 0
      %p98 = por %p96, %p97
      %p99 = scmp.ne.s32.totalorder %s91, %s93
      %p100 = scmp.eq.s32.totalorder %s20, 1
      %p101 = por %p99, %p100
      %p102 = scmp.ne.s32.totalorder %s93, %s94
      %p103 = scmp.eq.s32.totalorder %s20, 0
      %p104 = por %p102, %p103
      %p105 = scmp.ne.s32.totalorder %s93, %s94
      %p106 = scmp.eq.s32.totalorder %s21, 1
      %p107 = por %p105, %p106
      %p109 = scmp.ne.s32.totalorder %s94, %s108
      %p110 = scmp.eq.s32.totalorder %s21, 0
      %p111 = por %p109, %p110
      %s113 = sadd.s32 %s112, 1
      %p116 = scmp.eq.s32.totalorder %s15, 1
      %p117 = scmp.ne.s32.totalorder %s112, %s114
      %p118 = scmp.eq.s32.totalorder %s15, 0
      %p119 = por %p117, %p118
      %p120 = scmp.ne.s32.totalorder %s112, %s114
      %p121 = scmp.eq.s32.totalorder %s20, 1
      %p122 = por %p120, %p121
      %p123 = scmp.ne.s32.totalorder %s114, %s115
      %p124 = scmp.eq.s32.totalorder %s20, 0
      %p125 = por %p123, %p124
      %p126 = scmp.ne.s32.totalorder %s114, %s115
      %p127 = scmp.eq.s32.totalorder %s21, 1
      %p128 = por %p126, %p127
      %p130 = scmp.ne.s32.totalorder %s115, %s129
      %p131 = scmp.eq.s32.totalorder %s21, 0
      %p132 = por %p130, %p131
      %s134 = sadd.s32 %s133, 1
      %p137 = scmp.eq.s32.totalorder %s15, 1
      %p138 = scmp.ne.s32.totalorder %s133, %s135
      %p139 = scmp.eq.s32.totalorder %s15, 0
      %p140 = por %p138, %p139
      %p141 = scmp.ne.s32.totalorder %s133, %s135
      %p142 = scmp.eq.s32.totalorder %s20, 1
      %p143 = por %p141, %p142
      %p144 = scmp.ne.s32.totalorder %s135, %s136
      %p145 = scmp.eq.s32.totalorder %s20, 0
      %p146 = por %p144, %p145
      %p147 = scmp.ne.s32.totalorder %s135, %s136
      %p148 = scmp.eq.s32.totalorder %s21, 1
      %p149 = por %p147, %p148
      %p151 = scmp.ne.s32.totalorder %s136, %s150
      %p152 = scmp.eq.s32.totalorder %s21, 0
      %p153 = por %p151, %p152
      %s154 = ssub.s32 %s15, %s22
      %p155 = scmp.eq.s32.totalorder %s154, 0
      %s157 = sadd.s32 %s156, 1
      %s158 = scalar_select %p155, %s156, %s157
      %p161 = pneg %p155
      %p162 = scmp.eq.s32.totalorder %s15, 1
      %p163 = por %p161, %p162
      %p164 = scmp.ne.s32.totalorder %s156, %s159
      %p165 = scmp.eq.s32.totalorder %s15, 0
      %p166 = por %p164, %p165
      %p167 = scmp.ne.s32.totalorder %s156, %s159
      %p168 = scmp.eq.s32.totalorder %s20, 1
      %p169 = por %p167, %p168
      %p170 = scmp.ne.s32.totalorder %s159, %s160
      %p171 = scmp.eq.s32.totalorder %s20, 0
      %p172 = por %p170, %p171
      %p173 = scmp.ne.s32.totalorder %s159, %s160
      %p174 = scmp.eq.s32.totalorder %s21, 1
      %p175 = por %p173, %p174
      %p177 = scmp.ne.s32.totalorder %s160, %s176
      %p178 = scmp.eq.s32.totalorder %s21, 0
      %p179 = por %p177, %p178
      %p180 = scmp.le.s32.totalorder 1, %s15
      %p181 = scmp.lt.s32.totalorder %s15, 3
      %p182 = pnand %p180, %p181
      %p183 = pneg %p182
      // Predicated region
      $region9: #{encoder_layer.3} parent=5 // pred_check
        _
      $region10: #{encoder_layer.3} parent=5 // pred_check_branch
        %185 = sbr.rel (%p182) target = $region12
      $region11: #{encoder_layer.3} parent=5 // pred_region
        %s186 = ssub.s32 %s15, 1
        // Predicated region
        $region13: #{encoder_layer.3} parent=11 // pred_check
          %p187 = pneg %p62
        $region14: #{encoder_layer.3} parent=11 // pred_check_branch
          %189 = sbr.rel (%p187) target = $region16
        $region15: #{encoder_layer.3} parent=11 // pred_region
          _
        $region16: #{encoder_layer.3} parent=11 // pred_fallthru
          _
        // Predicated region
        $region17: #{encoder_layer.3} parent=11 // pred_check
          %p190 = pneg %p83
        $region18: #{encoder_layer.3} parent=11 // pred_check_branch
          %192 = sbr.rel (%p190) target = $region20
        $region19: #{encoder_layer.3} parent=11 // pred_region
          _
        $region20: #{encoder_layer.3} parent=11 // pred_fallthru
          _
        // Predicated region
        $region21: #{encoder_layer.3} parent=11 // pred_check
          %p193 = pneg %p104
        $region22: #{encoder_layer.3} parent=11 // pred_check_branch
          %195 = sbr.rel (%p193) target = $region24
        $region23: #{encoder_layer.3} parent=11 // pred_region
          _
        $region24: #{encoder_layer.3} parent=11 // pred_fallthru
          _
        // Predicated region
        $region25: #{encoder_layer.3} parent=11 // pred_check
          %p196 = pneg %p125
        $region26: #{encoder_layer.3} parent=11 // pred_check_branch
          %198 = sbr.rel (%p196) target = $region28
        $region27: #{encoder_layer.3} parent=11 // pred_region
          _
        $region28: #{encoder_layer.3} parent=11 // pred_fallthru
          _
        // Predicated region
        $region29: #{encoder_layer.3} parent=11 // pred_check
          %p199 = pneg %p146
        $region30: #{encoder_layer.3} parent=11 // pred_check_branch
          %201 = sbr.rel (%p199) target = $region32
        $region31: #{encoder_layer.3} parent=11 // pred_region
          _
        $region32: #{encoder_layer.3} parent=11 // pred_fallthru
          _
      $region12: #{encoder_layer.3} parent=5 // pred_fallthru
        _
      %p202 = scmp.lt.s32.totalorder %s15, 2
      // Predicated region
      $region33: #{encoder_layer.3} parent=5 // pred_check
        %p203 = pneg %p202
      $region34: #{encoder_layer.3} parent=5 // pred_check_branch
        %205 = sbr.rel (%p203) target = $region36
      $region35: #{encoder_layer.3} parent=5 // pred_region
        // Predicated region
        $region37: #{encoder_layer.3} parent=35 // pred_check
          %p206 = pneg %p35
        $region38: #{encoder_layer.3} parent=35 // pred_check_branch
          %208 = sbr.rel (%p206) target = $region40
        $region39: #{encoder_layer.3} parent=35 // pred_region
          %p209 = scmp.lt.s32.totalorder %s15, 1
          %s210 = scalar_select %p209, %s15, 1
          %s211 = smul.addr %s210, 8
          %s212 = scalar_lea.vmem %s0, %s211
        $region40: #{encoder_layer.3} parent=35 // pred_fallthru
          _
      $region36: #{encoder_layer.3} parent=5 // pred_fallthru
        _
      %p213 = scmp.le.s32.totalorder 1, %s15
      %p214 = scmp.lt.s32.totalorder %s15, 3
      %p215 = pnand %p213, %p214
      %p216 = pneg %p215
      // Predicated region
      $region41: #{encoder_layer.3} parent=5 // pred_check
        _
      $region42: #{encoder_layer.3} parent=5 // pred_check_branch
        %218 = sbr.rel (%p215) target = $region44
      $region43: #{encoder_layer.3} parent=5 // pred_region
        %s219 = ssub.s32 %s15, 1
        %p220 = scmp.lt.s32.totalorder %s20, 1
        %s221 = scalar_select %p220, %s20, 1
        %s222 = smul.addr %s221, 8
        %s223 = scalar_lea.vmem %s0, %s222
        %p224 = pneg %p41
        %p225 = pneg %p38
        %p226 = pneg %p62
        %p227 = pneg %p59
        %p228 = pneg %p83
        %p229 = pneg %p80
        %p230 = pneg %p104
        %p231 = pneg %p101
        %p232 = pneg %p125
        %p233 = pneg %p122
        %p234 = pneg %p146
        %p235 = pneg %p143
        %p236 = pneg %p172
        %p237 = pneg %p169
        %s238 = sand.u32 %s159, 1
        %s239 = scalar_lea.sflag [#allocation3], %s238
        %s240 = sand.u32 %s159, 1
        %s241 = smul.addr %s240, 8
        %s242 = scalar_lea.vmem [#allocation2], %s241
        %p243 = scmp.lt.s32.totalorder %s20, 1
        %s244 = scalar_select %p243, %s20, 1
        %s245 = smul.addr %s244, 8
        %s246 = scalar_lea.vmem %s0, %s245
        %v248 = vld [vmem:[%s246] sm:$0xff]
        %v249 = vld [vmem:[%s1] sm:$0xff]
        %v250 = vadd.f32 %v248, %v249
        %v251 = vpack.c.bf16 %v250, %v250
        %v252 = vld [vmem:[%s2] sm:$0xf]
        %v253 = vld [vmem:[%s2 + $0x4] sm:$0xf]
        %v254 = vld [vmem:[%s2 + $0x8] sm:$0xf]
        %v255 = vld [vmem:[%s2 + $0xc] sm:$0xf]
        %v256 = vld [vmem:[%s3] sm:$0x1]
        %v258 = vlaneseq
        %v259 = vshrl.u32 %v258, 7
        %v260 = vsub.s32 0, %v259
        %v261 = vrot.slane %v256, %v260
        %v267 = vunpack.c.l.b16 %v252
        %v268 = vunpack.c.l.b16 %v253
        %v269 = vunpack.c.l.b16 %v254
        %v270 = vunpack.c.l.b16 %v255
        %v271 = vpack.c.b16 %v268, %v267
        %v272 = vpack.c.b16 %v270, %v269
        %vm275 = vcmask 261120
        %v277 = vsel %vm275, %v251, 0
        %279 = vmatprep.subr.bf16.mxu0 0
        %280 = vmatpush1.bf16.msra.mxu0 %v271
        %281 = vmatprep.subr.bf16.mxu0 0
        %282 = vmatpush1.bf16.msra.mxu0 %v272
        %283 = vmatprep.subr.bf16.mxu0 0
        %284 = vmatpush1.bf16.msra.mxu0 0
        %285 = vmatprep.subr.bf16.mxu0 0
        %286 = vmatpush1.bf16.msra.mxu0 0
        %287 = vmatprep.subr.bf16.mxu0 0
        %288 = vmatpush1.bf16.msra.mxu0 0
        %289 = vmatprep.subr.bf16.mxu0 0
        %290 = vmatpush1.bf16.msra.mxu0 0
        %291 = vmatprep.subr.bf16.mxu0 0
        %292 = vmatpush1.bf16.msra.mxu0 0
        %293 = vmatprep.subr.bf16.mxu0 0
        %294 = vmatpush1.bf16.msra.mxu0 0
        %295 = vmatprep.subr.bf16.mxu0 0
        %296 = vmatpush1.bf16.msra.mxu0 0
        %297 = vmatprep.subr.bf16.mxu0 0
        %298 = vmatpush1.bf16.msra.mxu0 0
        %299 = vmatprep.subr.bf16.mxu0 0
        %300 = vmatpush1.bf16.msra.mxu0 0
        %301 = vmatprep.subr.bf16.mxu0 0
        %302 = vmatpush1.bf16.msra.mxu0 0
        %303 = vmatprep.subr.bf16.mxu0 0
        %304 = vmatpush1.bf16.msra.mxu0 0
        %305 = vmatprep.subr.bf16.mxu0 0
        %306 = vmatpush1.bf16.msra.mxu0 0
        %307 = vmatprep.subr.bf16.mxu0 0
        %308 = vmatpush1.bf16.msra.mxu0 0
        %309 = vmatprep.subr.bf16.mxu0 0
        %310 = vmatpush1.bf16.msra.mxu0 0
        %311 = vmatprep.mubr.bf16.mxu0 0
        %312 = vmatmul.mubr.bf16.gmra.mrb[0].mxu0 %v277
        %v313 = vpop.f32.mrb[0].mxu0
        %v314 = vadd.f32 %v261, %v313
        %v315 = vpop.f32.mrb[0].mxu0
        %v316 = vpop.f32.mrb[0].mxu0
        %v317 = vpop.f32.mrb[0].mxu0
        %318 = vdwg.mxu0
        %v319 = vmax.f32 %v314, 0.0
        %v320 = vpack.c.bf16 %v319, %v319
        %v321 = vld [vmem:[%s4] sm:$0xf]
        %v322 = vld [vmem:[%s4 + $0x4] sm:$0xf]
        %v323 = vld [vmem:[%s4 + $0x8] sm:$0xf]
        %v324 = vld [vmem:[%s4 + $0xc] sm:$0xf]
        %v325 = vld [vmem:[%s4 + $0x10] sm:$0xf]
        %v326 = vld [vmem:[%s4 + $0x14] sm:$0xf]
        %v327 = vld [vmem:[%s4 + $0x18] sm:$0xf]
        %v328 = vld [vmem:[%s4 + $0x1c] sm:$0xf]
        %v329 = vld [vmem:[%s5] sm:$0x1]
        %v331 = vlaneseq
        %v332 = vshrl.u32 %v331, 7
        %v333 = vsub.s32 0, %v332
        %v334 = vrot.slane %v329, %v333
        %v344 = vunpack.c.l.b16 %v321
        %v345 = vunpack.c.l.b16 %v322
        %v346 = vunpack.c.l.b16 %v323
        %v347 = vunpack.c.l.b16 %v324
        %v348 = vunpack.c.l.b16 %v325
        %v349 = vunpack.c.l.b16 %v326
        %v350 = vunpack.c.l.b16 %v327
        %v351 = vunpack.c.l.b16 %v328
        %v352 = vpack.c.b16 %v345, %v344
        %v353 = vpack.c.b16 %v347, %v346
        %v354 = vpack.c.b16 %v349, %v348
        %v355 = vpack.c.b16 %v351, %v350
        %vm360 = vcmask 523264
        %v362 = vsel %vm360, %v320, 0
        %364 = vmatprep.subr.bf16.mxu0 0
        %365 = vmatpush1.bf16.msra.mxu0 %v352
        %366 = vmatprep.subr.bf16.mxu0 0
        %367 = vmatpush1.bf16.msra.mxu0 %v353
        %368 = vmatprep.subr.bf16.mxu0 0
        %369 = vmatpush1.bf16.msra.mxu0 %v354
        %370 = vmatprep.subr.bf16.mxu0 0
        %371 = vmatpush1.bf16.msra.mxu0 %v355
        %372 = vmatprep.subr.bf16.mxu0 0
        %373 = vmatpush1.bf16.msra.mxu0 0
        %374 = vmatprep.subr.bf16.mxu0 0
        %375 = vmatpush1.bf16.msra.mxu0 0
        %376 = vmatprep.subr.bf16.mxu0 0
        %377 = vmatpush1.bf16.msra.mxu0 0
        %378 = vmatprep.subr.bf16.mxu0 0
        %379 = vmatpush1.bf16.msra.mxu0 0
        %380 = vmatprep.subr.bf16.mxu0 0
        %381 = vmatpush1.bf16.msra.mxu0 0
        %382 = vmatprep.subr.bf16.mxu0 0
        %383 = vmatpush1.bf16.msra.mxu0 0
        %384 = vmatprep.subr.bf16.mxu0 0
        %385 = vmatpush1.bf16.msra.mxu0 0
        %386 = vmatprep.subr.bf16.mxu0 0
        %387 = vmatpush1.bf16.msra.mxu0 0
        %388 = vmatprep.subr.bf16.mxu0 0
        %389 = vmatpush1.bf16.msra.mxu0 0
        %390 = vmatprep.subr.bf16.mxu0 0
        %391 = vmatpush1.bf16.msra.mxu0 0
        %392 = vmatprep.subr.bf16.mxu0 0
        %393 = vmatpush1.bf16.msra.mxu0 0
        %394 = vmatprep.subr.bf16.mxu0 0
        %395 = vmatpush1.bf16.msra.mxu0 0
        %396 = vmatprep.mubr.bf16.mxu0 0
        %397 = vmatmul.mubr.bf16.gmra.mrb[0].mxu0 %v362
        %v398 = vpop.f32.mrb[0].mxu0
        %v399 = vadd.f32 %v334, %v398
        %v400 = vpop.f32.mrb[0].mxu0
        %v401 = vpop.f32.mrb[0].mxu0
        %v402 = vpop.f32.mrb[0].mxu0
        %403 = vdwg.mxu0
        %v404 = vadd.f32 %v250, %v399
        %405 = vst.msk [vmem:[%s242] sm:$0xff] %vm275, %v404
        %s406 = sand.u32 %s159, 1
        %s407 = scalar_lea.sflag [#allocation3], %s406
        %s408 = sand.u32 %s159, 1
        %s409 = smul.addr %s408, 8
        %s410 = scalar_lea.vmem [#allocation2], %s409
        // Predicated region
        $region45: #{encoder_layer.3} parent=43 // pred_check
          %p411 = pneg %p169
        $region46: #{encoder_layer.3} parent=43 // pred_check_branch
          %413 = sbr.rel (%p411) target = $region48
        $region47: #{encoder_layer.3} parent=43 // pred_region
          %s415 = ssub.s32 128, 128
          %416 = vsyncadd %s407, %s415
          %s417 = smul.addr %s20, 128
          %s418 = scalar_lea.hbm %s6, %s417
          %s420 = sshll.u32 %s410, 4
          %s421 = int_to_ptr.vmem [resolvable:$true] %s420
          %423 = dma.vmem_to_hbm [thread:$0]  %s421, 128, %s418, %s407
        $region48: #{encoder_layer.3} parent=43 // pred_fallthru
          _
      $region44: #{encoder_layer.3} parent=5 // pred_fallthru
        _
      %p424 = scmp.le.s32.totalorder 2, %s15
      // Predicated region
      $region49: #{encoder_layer.3} parent=5 // pred_check
        %p425 = pneg %p424
      $region50: #{encoder_layer.3} parent=5 // pred_check_branch
        %427 = sbr.rel (%p425) target = $region52
      $region51: #{encoder_layer.3} parent=5 // pred_region
        %s428 = ssub.s32 %s15, 2
        // Predicated region
        $region53: #{encoder_layer.3} parent=51 // pred_check
          %p429 = pneg %p175
        $region54: #{encoder_layer.3} parent=51 // pred_check_branch
          %431 = sbr.rel (%p429) target = $region56
        $region55: #{encoder_layer.3} parent=51 // pred_region
          %s432 = sand.u32 %s160, 1
          %s433 = scalar_lea.sflag [#allocation3], %s432
          %s434 = sand.u32 %s160, 1
          %s435 = smul.addr %s434, 8
          %s436 = scalar_lea.vmem [#allocation2], %s435
          %437 = dma.done %s433, 128
        $region56: #{encoder_layer.3} parent=51 // pred_fallthru
          _
      $region52: #{encoder_layer.3} parent=5 // pred_fallthru
        _
    $region6: #{encoder_layer.3} parent=1 // loop_footer
      %s19 = sadd.s32 1, %s15
    $region7: #{encoder_layer.3} parent=1 // loop_footer_branch
      %14 = sbr.rel target = $region3
    $region8: #{encoder_layer.3} parent=1 // loop_exit
      _
    %438 = vsyncpa [#allocation3], 1
    %s439 = scalar_lea.sflag [#allocation3], 1
    %440 = vsyncpa %s439, 1

// kernel: encoder_layer.2
$region0: #{encoder_layer.2}
  #allocation0 [shape = 'u32[]', space=smem, size = 0x4, offset = 0x4, fixed_abs, tag = 'smem constant byte address 0x4 - core index']
  #allocation1 [shape = 'u32[144,128]{1,0:T(1,128)}', space=vmem, size = 0x12000, scoped, tag = 'internal scratch']
  #allocation2 [shape = 'f32[12,8,8]{2,1,0:T(8,128)}', space=vmem, size = 0xc000, scoped, tag = 'scratch operand']
  #allocation3 [shape = 'f32[8,32]{1,0:T(8,128)}', space=vmem, size = 0x1000, scoped, tag = 'scratch operand']
  %s0 = inlined_call_operand.vmem [shape: f32[8,32], index: 0, kind: input, shape index: {}]
  %s1 = inlined_call_operand.vmem [shape: f32[8,8], index: 1, kind: input, shape index: {}]
  %s2 = inlined_call_operand.vmem [shape: bf16[32,96], index: 2, kind: input, shape index: {}]
  %s3 = inlined_call_operand.vmem [shape: f32[1,96], index: 3, kind: input, shape index: {}]
  %s4 = inlined_call_operand.vmem [shape: bf16[32,32], index: 4, kind: input, shape index: {}]
  %s5 = inlined_call_operand.vmem [shape: f32[1,32], index: 5, kind: input, shape index: {}]
  %s6 = inlined_call_operand.vmem [shape: f32[8,32], index: 6, kind: output, shape index: {}]
  %s7 = sld [smem:[#allocation0]]
  $region34: #{encoder_layer.2} parent=0
    _
  %s9 = ssub.s32 1, %s7
  %s10 = scalar_select 0, %s9, %s7
  // Predicated region
  $region2: #{encoder_layer.2} parent=0 // pred_check
    _
  $region3: #{encoder_layer.2} parent=0 // pred_check_branch
    %12 = sbr.rel (0) target = $region5
  $region4: #{encoder_layer.2} parent=0 // pred_region
    _
  $region5: #{encoder_layer.2} parent=0 // pred_fallthru
    _
  // Predicated region
  $region6: #{encoder_layer.2} parent=0 // pred_check
    _
  $region7: #{encoder_layer.2} parent=0 // pred_check_branch
    %14 = sbr.rel (0) target = $region9
  $region8: #{encoder_layer.2} parent=0 // pred_region
    _
  $region9: #{encoder_layer.2} parent=0 // pred_fallthru
    _
  // Predicated region
  $region10: #{encoder_layer.2} parent=0 // pred_check
    _
  $region11: #{encoder_layer.2} parent=0 // pred_check_branch
    %16 = sbr.rel (0) target = $region13
  $region12: #{encoder_layer.2} parent=0 // pred_region
    _
  $region13: #{encoder_layer.2} parent=0 // pred_fallthru
    _
  // Predicated region
  $region14: #{encoder_layer.2} parent=0 // pred_check
    _
  $region15: #{encoder_layer.2} parent=0 // pred_check_branch
    %18 = sbr.rel (0) target = $region17
  $region16: #{encoder_layer.2} parent=0 // pred_region
    _
  $region17: #{encoder_layer.2} parent=0 // pred_fallthru
    _
  // Predicated region
  $region18: #{encoder_layer.2} parent=0 // pred_check
    _
  $region19: #{encoder_layer.2} parent=0 // pred_check_branch
    %20 = sbr.rel (0) target = $region21
  $region20: #{encoder_layer.2} parent=0 // pred_region
    _
  $region21: #{encoder_layer.2} parent=0 // pred_fallthru
    _
  // Predicated region
  $region22: #{encoder_layer.2} parent=0 // pred_check
    _
  $region23: #{encoder_layer.2} parent=0 // pred_check_branch
    %22 = sbr.rel (0) target = $region25
  $region24: #{encoder_layer.2} parent=0 // pred_region
    _
  $region25: #{encoder_layer.2} parent=0 // pred_fallthru
    _
  %v24 = vld [vmem:[%s0] sm:$0xff]
  %v25 = vpack.c.bf16 %v24, %v24
  %v26 = vld [vmem:[%s2] sm:$0xf]
  %v27 = vld [vmem:[%s2 + $0x4] sm:$0xf]
  %v28 = vld [vmem:[%s2 + $0x8] sm:$0xf]
  %v29 = vld [vmem:[%s2 + $0xc] sm:$0xf]
  %v30 = vld [vmem:[%s3] sm:$0x1]
  %v32 = vlaneseq
  %v33 = vshrl.u32 %v32, 7
  %v34 = vsub.s32 0, %v33
  %v35 = vrot.slane %v30, %v34
  %v41 = vunpack.c.l.b16 %v26
  %v42 = vunpack.c.l.b16 %v27
  %v43 = vunpack.c.l.b16 %v28
  %v44 = vunpack.c.l.b16 %v29
  %v45 = vpack.c.b16 %v42, %v41
  %v46 = vpack.c.b16 %v44, %v43
  %vm49 = vcmask 261120
  %v51 = vsel %vm49, %v25, 0
  %53 = vmatprep.subr.bf16.mxu0 0
  %54 = vmatpush1.bf16.msra.mxu0 %v45
  %55 = vmatprep.subr.bf16.mxu0 0
  %56 = vmatpush1.bf16.msra.mxu0 %v46
  %57 = vmatprep.subr.bf16.mxu0 0
  %58 = vmatpush1.bf16.msra.mxu0 0
  %59 = vmatprep.subr.bf16.mxu0 0
  %60 = vmatpush1.bf16.msra.mxu0 0
  %61 = vmatprep.subr.bf16.mxu0 0
  %62 = vmatpush1.bf16.msra.mxu0 0
  %63 = vmatprep.subr.bf16.mxu0 0
  %64 = vmatpush1.bf16.msra.mxu0 0
  %65 = vmatprep.subr.bf16.mxu0 0
  %66 = vmatpush1.bf16.msra.mxu0 0
  %67 = vmatprep.subr.bf16.mxu0 0
  %68 = vmatpush1.bf16.msra.mxu0 0
  %69 = vmatprep.subr.bf16.mxu0 0
  %70 = vmatpush1.bf16.msra.mxu0 0
  %71 = vmatprep.subr.bf16.mxu0 0
  %72 = vmatpush1.bf16.msra.mxu0 0
  %73 = vmatprep.subr.bf16.mxu0 0
  %74 = vmatpush1.bf16.msra.mxu0 0
  %75 = vmatprep.subr.bf16.mxu0 0
  %76 = vmatpush1.bf16.msra.mxu0 0
  %77 = vmatprep.subr.bf16.mxu0 0
  %78 = vmatpush1.bf16.msra.mxu0 0
  %79 = vmatprep.subr.bf16.mxu0 0
  %80 = vmatpush1.bf16.msra.mxu0 0
  %81 = vmatprep.subr.bf16.mxu0 0
  %82 = vmatpush1.bf16.msra.mxu0 0
  %83 = vmatprep.subr.bf16.mxu0 0
  %84 = vmatpush1.bf16.msra.mxu0 0
  %85 = vmatprep.mubr.bf16.mxu0 0
  %86 = vmatmul.mubr.bf16.gmra.mrb[0].mxu0 %v51
  %v87 = vpop.f32.mrb[0].mxu0
  %v88 = vadd.f32 %v35, %v87
  %v89 = vpop.f32.mrb[0].mxu0
  %v90 = vpop.f32.mrb[0].mxu0
  %v91 = vpop.f32.mrb[0].mxu0
  %92 = vdwg.mxu0
  %vm93 = vcmask 64512
  %94 = vst.msk [vmem:[#allocation2] sm:$0xff] %vm93, %v88
  %96 = vrot.lane.b32.xlu0 %v88, 120
  %v97 = vpop.permute.xlu0 %96
  %s99 = scalar_lea.vmem [#allocation2], 8
  %100 = vst.msk [vmem:[%s99] sm:$0xff] %vm93, %v97
  %101 = vrot.lane.b32.xlu0 %v88, 112
  %v102 = vpop.permute.xlu0 %101
  %s104 = scalar_lea.vmem [#allocation2], 16
  %105 = vst.msk [vmem:[%s104] sm:$0xff] %vm93, %v102
  %106 = vrot.lane.b32.xlu0 %v88, 104
  %v107 = vpop.permute.xlu0 %106
  %s109 = scalar_lea.vmem [#allocation2], 24
  %110 = vst.msk [vmem:[%s109] sm:$0xff] %vm93, %v107
  %111 = vrot.lane.b32.xlu0 %v88, 96
  %v112 = vpop.permute.xlu0 %111
  %s114 = scalar_lea.vmem [#allocation2], 32
  %115 = vst.msk [vmem:[%s114] sm:$0xff] %vm93, %v112
  %116 = vrot.lane.b32.xlu0 %v88, 88
  %v117 = vpop.permute.xlu0 %116
  %s119 = scalar_lea.vmem [#allocation2], 40
  %120 = vst.msk [vmem:[%s119] sm:$0xff] %vm93, %v117
  %121 = vrot.lane.b32.xlu0 %v88, 80
  %v122 = vpop.permute.xlu0 %121
  %s124 = scalar_lea.vmem [#allocation2], 48
  %125 = vst.msk [vmem:[%s124] sm:$0xff] %vm93, %v122
  %126 = vrot.lane.b32.xlu0 %v88, 72
  %v127 = vpop.permute.xlu0 %126
  %s129 = scalar_lea.vmem [#allocation2], 56
  %130 = vst.msk [vmem:[%s129] sm:$0xff] %vm93, %v127
  %131 = vrot.lane.b32.xlu0 %v88, 64
  %v132 = vpop.permute.xlu0 %131
  %s134 = scalar_lea.vmem [#allocation2], 64
  %135 = vst.msk [vmem:[%s134] sm:$0xff] %vm93, %v132
  %136 = vrot.lane.b32.xlu0 %v88, 56
  %v137 = vpop.permute.xlu0 %136
  %s139 = scalar_lea.vmem [#allocation2], 72
  %140 = vst.msk [vmem:[%s139] sm:$0xff] %vm93, %v137
  %141 = vrot.lane.b32.xlu0 %v88, 48
  %v142 = vpop.permute.xlu0 %141
  %s144 = scalar_lea.vmem [#allocation2], 80
  %145 = vst.msk [vmem:[%s144] sm:$0xff] %vm93, %v142
  %146 = vrot.lane.b32.xlu0 %v88, 40
  %v147 = vpop.permute.xlu0 %146
  %s149 = scalar_lea.vmem [#allocation2], 88
  %150 = vst.msk [vmem:[%s149] sm:$0xff] %vm93, %v147
  %v151 = vld [vmem:[#allocation2] sm:$0xff]
  %v152 = vld [vmem:[#allocation2 + $0x8] sm:$0xff]
  %v153 = vld [vmem:[#allocation2 + $0x10] sm:$0xff]
  %v154 = vld [vmem:[#allocation2 + $0x18] sm:$0xff]
  %v155 = vld [vmem:[#allocation2 + $0x20] sm:$0xff]
  %v156 = vld [vmem:[#allocation2 + $0x28] sm:$0xff]
  %v157 = vld [vmem:[#allocation2 + $0x30] sm:$0xff]
  %v158 = vld [vmem:[#allocation2 + $0x38] sm:$0xff]
  %v159 = vld [vmem:[#allocation2 + $0x40] sm:$0xff]
  %v160 = vld [vmem:[#allocation2 + $0x48] sm:$0xff]
  %v161 = vld [vmem:[#allocation2 + $0x50] sm:$0xff]
  %v162 = vld [vmem:[#allocation2 + $0x58] sm:$0xff]
  %v163 = vpack.c.bf16 %v151, %v151
  %v164 = vpack.c.bf16 %v152, %v152
  %v165 = vpack.c.bf16 %v153, %v153
  %v166 = vpack.c.bf16 %v154, %v154
  %v167 = vpack.c.bf16 %v155, %v155
  %v168 = vpack.c.bf16 %v156, %v156
  %v169 = vpack.c.bf16 %v157, %v157
  %v170 = vpack.c.bf16 %v158, %v158
  %v171 = vpack.c.bf16 %v159, %v159
  %v172 = vpack.c.bf16 %v160, %v160
  %v173 = vpack.c.bf16 %v161, %v161
  %v174 = vpack.c.bf16 %v162, %v162
  %v175 = vld [vmem:[%s1] sm:$0xff]
  %v177 = vsel %vm93, %v163, 0
  %v180 = vsel %vm93, %v167, 0
  %182 = vmatprep.subr.bf16.mxu0 0
  %183 = vmatpush1.bf16.xpose.msra.mxu0 %v180
  %184 = vmatprep.subr.bf16.mxu0 0
  %185 = vmatpush1.bf16.xpose.msra.mxu0 0
  %186 = vmatprep.subr.bf16.mxu0 0
  %187 = vmatpush1.bf16.xpose.msra.mxu0 0
  %188 = vmatprep.subr.bf16.mxu0 0
  %189 = vmatpush1.bf16.xpose.msra.mxu0 0
  %190 = vmatprep.subr.bf16.mxu0 0
  %191 = vmatpush1.bf16.xpose.msra.mxu0 0
  %192 = vmatprep.subr.bf16.mxu0 0
  %193 = vmatpush1.bf16.xpose.msra.mxu0 0
  %194 = vmatprep.subr.bf16.mxu0 0
  %195 = vmatpush1.bf16.xpose.msra.mxu0 0
  %196 = vmatprep.subr.bf16.mxu0 0
  %197 = vmatpush1.bf16.xpose.msra.mxu0 0
  %198 = vmatprep.subr.bf16.mxu0 0
  %199 = vmatpush1.bf16.xpose.msra.mxu0 0
  %200 = vmatprep.subr.bf16.mxu0 0
  %201 = vmatpush1.bf16.xpose.msra.mxu0 0
  %202 = vmatprep.subr.bf16.mxu0 0
  %203 = vmatpush1.bf16.xpose.msra.mxu0 0
  %204 = vmatprep.subr.bf16.mxu0 0
  %205 = vmatpush1.bf16.xpose.msra.mxu0 0
  %206 = vmatprep.subr.bf16.mxu0 0
  %207 = vmatpush1.bf16.xpose.msra.mxu0 0
  %208 = vmatprep.subr.bf16.mxu0 0
  %209 = vmatpush1.bf16.xpose.msra.mxu0 0
  %210 = vmatprep.subr.bf16.mxu0 0
  %211 = vmatpush1.bf16.xpose.msra.mxu0 0
  %212 = vmatprep.subr.bf16.mxu0 0
  %213 = vmatpush1.bf16.xpose.msra.mxu0 0
  %214 = vmatprep.mubr.bf16.mxu0 0
  %215 = vmatmul.mubr.bf16.gmra.mrb[0].mxu0 %v177
  %v216 = vpop.f32.mrb[0].mxu0
  %v217 = vadd.f32 %v175, %v216
  %v218 = vpop.f32.mrb[0].mxu0
  %v219 = vpop.f32.mrb[0].mxu0
  %v220 = vpop.f32.mrb[0].mxu0
  %221 = vdwg.mxu0
  %v223 = vsel %vm93, %v164, 0
  %v226 = vsel %vm93, %v168, 0
  %228 = vmatprep.subr.bf16.mxu0 0
  %229 = vmatpush1.bf16.xpose.msra.mxu0 %v226
  %230 = vmatprep.subr.bf16.mxu0 0
  %231 = vmatpush1.bf16.xpose.msra.mxu0 0
  %232 = vmatprep.subr.bf16.mxu0 0
  %233 = vmatpush1.bf16.xpose.msra.mxu0 0
  %234 = vmatprep.subr.bf16.mxu0 0
  %235 = vmatpush1.bf16.xpose.msra.mxu0 0
  %236 = vmatprep.subr.bf16.mxu0 0
  %237 = vmatpush1.bf16.xpose.msra.mxu0 0
  %238 = vmatprep.subr.bf16.mxu0 0
  %239 = vmatpush1.bf16.xpose.msra.mxu0 0
  %240 = vmatprep.subr.bf16.mxu0 0
  %241 = vmatpush1.bf16.xpose.msra.mxu0 0
  %242 = vmatprep.subr.bf16.mxu0 0
  %243 = vmatpush1.bf16.xpose.msra.mxu0 0
  %244 = vmatprep.subr.bf16.mxu0 0
  %245 = vmatpush1.bf16.xpose.msra.mxu0 0
  %246 = vmatprep.subr.bf16.mxu0 0
  %247 = vmatpush1.bf16.xpose.msra.mxu0 0
  %248 = vmatprep.subr.bf16.mxu0 0
  %249 = vmatpush1.bf16.xpose.msra.mxu0 0
  %250 = vmatprep.subr.bf16.mxu0 0
  %251 = vmatpush1.bf16.xpose.msra.mxu0 0
  %252 = vmatprep.subr.bf16.mxu0 0
  %253 = vmatpush1.bf16.xpose.msra.mxu0 0
  %254 = vmatprep.subr.bf16.mxu0 0
  %255 = vmatpush1.bf16.xpose.msra.mxu0 0
  %256 = vmatprep.subr.bf16.mxu0 0
  %257 = vmatpush1.bf16.xpose.msra.mxu0 0
  %258 = vmatprep.subr.bf16.mxu0 0
  %259 = vmatpush1.bf16.xpose.msra.mxu0 0
  %260 = vmatprep.mubr.bf16.mxu0 0
  %261 = vmatmul.mubr.bf16.gmra.mrb[0].mxu0 %v223
  %v262 = vpop.f32.mrb[0].mxu0
  %v263 = vadd.f32 %v175, %v262
  %v264 = vpop.f32.mrb[0].mxu0
  %v265 = vpop.f32.mrb[0].mxu0
  %v266 = vpop.f32.mrb[0].mxu0
  %267 = vdwg.mxu0
  %v269 = vsel %vm93, %v165, 0
  %v272 = vsel %vm93, %v169, 0
  %274 = vmatprep.subr.bf16.mxu0 0
  %275 = vmatpush1.bf16.xpose.msra.mxu0 %v272
  %276 = vmatprep.subr.bf16.mxu0 0
  %277 = vmatpush1.bf16.xpose.msra.mxu0 0
  %278 = vmatprep.subr.bf16.mxu0 0
  %279 = vmatpush1.bf16.xpose.msra.mxu0 0
  %280 = vmatprep.subr.bf16.mxu0 0
  %281 = vmatpush1.bf16.xpose.msra.mxu0 0
  %282 = vmatprep.subr.bf16.mxu0 0
  %283 = vmatpush1.bf16.xpose.msra.mxu0 0
  %284 = vmatprep.subr.bf16.mxu0 0
  %285 = vmatpush1.bf16.xpose.msra.mxu0 0
  %286 = vmatprep.subr.bf16.mxu0 0
  %287 = vmatpush1.bf16.xpose.msra.mxu0 0
  %288 = vmatprep.subr.bf16.mxu0 0
  %289 = vmatpush1.bf16.xpose.msra.mxu0 0
  %290 = vmatprep.subr.bf16.mxu0 0
  %291 = vmatpush1.bf16.xpose.msra.mxu0 0
  %292 = vmatprep.subr.bf16.mxu0 0
  %293 = vmatpush1.bf16.xpose.msra.mxu0 0
  %294 = vmatprep.subr.bf16.mxu0 0
  %295 = vmatpush1.bf16.xpose.msra.mxu0 0
  %296 = vmatprep.subr.bf16.mxu0 0
  %297 = vmatpush1.bf16.xpose.msra.mxu0 0
  %298 = vmatprep.subr.bf16.mxu0 0
  %299 = vmatpush1.bf16.xpose.msra.mxu0 0
  %300 = vmatprep.subr.bf16.mxu0 0
  %301 = vmatpush1.bf16.xpose.msra.mxu0 0
  %302 = vmatprep.subr.bf16.mxu0 0
  %303 = vmatpush1.bf16.xpose.msra.mxu0 0
  %304 = vmatprep.subr.bf16.mxu0 0
  %305 = vmatpush1.bf16.xpose.msra.mxu0 0
  %306 = vmatprep.mubr.bf16.mxu0 0
  %307 = vmatmul.mubr.bf16.gmra.mrb[0].mxu0 %v269
  %v308 = vpop.f32.mrb[0].mxu0
  %v309 = vadd.f32 %v175, %v308
  %v310 = vpop.f32.mrb[0].mxu0
  %v311 = vpop.f32.mrb[0].mxu0
  %v312 = vpop.f32.mrb[0].mxu0
  %313 = vdwg.mxu0
  %v315 = vsel %vm93, %v166, 0
  %v318 = vsel %vm93, %v170, 0
  %320 = vmatprep.subr.bf16.mxu0 0
  %321 = vmatpush1.bf16.xpose.msra.mxu0 %v318
  %322 = vmatprep.subr.bf16.mxu0 0
  %323 = vmatpush1.bf16.xpose.msra.mxu0 0
  %324 = vmatprep.subr.bf16.mxu0 0
  %325 = vmatpush1.bf16.xpose.msra.mxu0 0
  %326 = vmatprep.subr.bf16.mxu0 0
  %327 = vmatpush1.bf16.xpose.msra.mxu0 0
  %328 = vmatprep.subr.bf16.mxu0 0
  %329 = vmatpush1.bf16.xpose.msra.mxu0 0
  %330 = vmatprep.subr.bf16.mxu0 0
  %331 = vmatpush1.bf16.xpose.msra.mxu0 0
  %332 = vmatprep.subr.bf16.mxu0 0
  %333 = vmatpush1.bf16.xpose.msra.mxu0 0
  %334 = vmatprep.subr.bf16.mxu0 0
  %335 = vmatpush1.bf16.xpose.msra.mxu0 0
  %336 = vmatprep.subr.bf16.mxu0 0
  %337 = vmatpush1.bf16.xpose.msra.mxu0 0
  %338 = vmatprep.subr.bf16.mxu0 0
  %339 = vmatpush1.bf16.xpose.msra.mxu0 0
  %340 = vmatprep.subr.bf16.mxu0 0
  %341 = vmatpush1.bf16.xpose.msra.mxu0 0
  %342 = vmatprep.subr.bf16.mxu0 0
  %343 = vmatpush1.bf16.xpose.msra.mxu0 0
  %344 = vmatprep.subr.bf16.mxu0 0
  %345 = vmatpush1.bf16.xpose.msra.mxu0 0
  %346 = vmatprep.subr.bf16.mxu0 0
  %347 = vmatpush1.bf16.xpose.msra.mxu0 0
  %348 = vmatprep.subr.bf16.mxu0 0
  %349 = vmatpush1.bf16.xpose.msra.mxu0 0
  %350 = vmatprep.subr.bf16.mxu0 0
  %351 = vmatpush1.bf16.xpose.msra.mxu0 0
  %352 = vmatprep.mubr.bf16.mxu0 0
  %353 = vmatmul.mubr.bf16.gmra.mrb[0].mxu0 %v315
  %v354 = vpop.f32.mrb[0].mxu0
  %v355 = vadd.f32 %v175, %v354
  %v356 = vpop.f32.mrb[0].mxu0
  %v357 = vpop.f32.mrb[0].mxu0
  %v358 = vpop.f32.mrb[0].mxu0
  %359 = vdwg.mxu0
  %v360 = vsel %vm93, %v217, -inf
  %361 = vmax.xlane.f32.xlu0 %v360
  %v362 = vpop.xlane.xlu0 %361
  %v363 = vsel %vm93, %v263, -inf
  %364 = vmax.xlane.f32.xlu0 %v363
  %v365 = vpop.xlane.xlu0 %364
  %v366 = vsel %vm93, %v309, -inf
  %367 = vmax.xlane.f32.xlu0 %v366
  %v368 = vpop.xlane.xlu0 %367
  %v369 = vsel %vm93, %v355, -inf
  %370 = vmax.xlane.f32.xlu0 %v369
  %v371 = vpop.xlane.xlu0 %370
  %v372 = vsub.f32 %v217, %v362
  %v373 = vsub.f32 %v263, %v365
  %v374 = vsub.f32 %v309, %v368
  %v375 = vsub.f32 %v355, %v371
  %v376 = vmul.f32 %v372, 1.442695
  %v377 = vpow.pop %v376
  %v378 = vmul.f32 %v373, 1.442695
  %v379 = vpow.pop %v378
  %v380 = vmul.f32 %v374, 1.442695
  %v381 = vpow.pop %v380
  %v382 = vmul.f32 %v375, 1.442695
  %v383 = vpow.pop %v382
  %v384 = vsel %vm93, %v377, 0.0
  %385 = vadd.xlane.f32.xlu0 %v384
  %v386 = vpop.xlane.xlu0 %385
  %v387 = vsel %vm93, %v379, 0.0
  %388 = vadd.xlane.f32.xlu0 %v387
  %v389 = vpop.xlane.xlu0 %388
  %v390 = vsel %vm93, %v381, 0.0
  %391 = vadd.xlane.f32.xlu0 %v390
  %v392 = vpop.xlane.xlu0 %391
  %v393 = vsel %vm93, %v383, 0.0
  %394 = vadd.xlane.f32.xlu0 %v393
  %v395 = vpop.xlane.xlu0 %394
  %v396 = vrcp.pop %v386
  %v397 = vrcp.pop %v389
  %v398 = vrcp.pop %v392
  %v399 = vrcp.pop %v395
  %v400 = vmul.f32 %v377, %v396
  %v401 = vmul.f32 %v379, %v397
  %v402 = vmul.f32 %v381, %v398
  %v403 = vmul.f32 %v383, %v399
  %v404 = vpack.c.bf16 %v400, %v400
  %v405 = vpack.c.bf16 %v401, %v401
  %v406 = vpack.c.bf16 %v402, %v402
  %v407 = vpack.c.bf16 %v403, %v403
  %v409 = vsel %vm93, %v404, 0
  %vm411 = vcmask 1043456
  %v413 = vsel %vm411, %v171, 0
  %415 = vmatprep.subr.bf16.mxu0 0
  %416 = vmatpush1.bf16.msra.mxu0 %v413
  %417 = vmatprep.subr.bf16.mxu0 0
  %418 = vmatpush1.bf16.msra.mxu0 0
  %419 = vmatprep.subr.bf16.mxu0 0
  %420 = vmatpush1.bf16.msra.mxu0 0
  %421 = vmatprep.subr.bf16.mxu0 0
  %422 = vmatpush1.bf16.msra.mxu0 0
  %423 = vmatprep.subr.bf16.mxu0 0
  %424 = vmatpush1.bf16.msra.mxu0 0
  %425 = vmatprep.subr.bf16.mxu0 0
  %426 = vmatpush1.bf16.msra.mxu0 0
  %427 = vmatprep.subr.bf16.mxu0 0
  %428 = vmatpush1.bf16.msra.mxu0 0
  %429 = vmatprep.subr.bf16.mxu0 0
  %430 = vmatpush1.bf16.msra.mxu0 0
  %431 = vmatprep.subr.bf16.mxu0 0
  %432 = vmatpush1.bf16.msra.mxu0 0
  %433 = vmatprep.subr.bf16.mxu0 0
  %434 = vmatpush1.bf16.msra.mxu0 0
  %435 = vmatprep.subr.bf16.mxu0 0
  %436 = vmatpush1.bf16.msra.mxu0 0
  %437 = vmatprep.subr.bf16.mxu0 0
  %438 = vmatpush1.bf16.msra.mxu0 0
  %439 = vmatprep.subr.bf16.mxu0 0
  %440 = vmatpush1.bf16.msra.mxu0 0
  %441 = vmatprep.subr.bf16.mxu0 0
  %442 = vmatpush1.bf16.msra.mxu0 0
  %443 = vmatprep.subr.bf16.mxu0 0
  %444 = vmatpush1.bf16.msra.mxu0 0
  %445 = vmatprep.subr.bf16.mxu0 0
  %446 = vmatpush1.bf16.msra.mxu0 0
  %447 = vmatprep.mubr.bf16.mxu0 0
  %448 = vmatmul.mubr.bf16.gmra.mrb[0].mxu0 %v409
  %v449 = vpop.f32.mrb[0].mxu0
  %v450 = vadd.f32 0.0, %v449
  %v451 = vpop.f32.mrb[0].mxu0
  %v452 = vpop.f32.mrb[0].mxu0
  %v453 = vpop.f32.mrb[0].mxu0
  %454 = vdwg.mxu0
  %v456 = vsel %vm93, %v405, 0
  %v459 = vsel %vm411, %v172, 0
  %461 = vmatprep.subr.bf16.mxu0 0
  %462 = vmatpush1.bf16.msra.mxu0 %v459
  %463 = vmatprep.subr.bf16.mxu0 0
  %464 = vmatpush1.bf16.msra.mxu0 0
  %465 = vmatprep.subr.bf16.mxu0 0
  %466 = vmatpush1.bf16.msra.mxu0 0
  %467 = vmatprep.subr.bf16.mxu0 0
  %468 = vmatpush1.bf16.msra.mxu0 0
  %469 = vmatprep.subr.bf16.mxu0 0
  %470 = vmatpush1.bf16.msra.mxu0 0
  %471 = vmatprep.subr.bf16.mxu0 0
  %472 = vmatpush1.bf16.msra.mxu0 0
  %473 = vmatprep.subr.bf16.mxu0 0
  %474 = vmatpush1.bf16.msra.mxu0 0
  %475 = vmatprep.subr.bf16.mxu0 0
  %476 = vmatpush1.bf16.msra.mxu0 0
  %477 = vmatprep.subr.bf16.mxu0 0
  %478 = vmatpush1.bf16.msra.mxu0 0
  %479 = vmatprep.subr.bf16.mxu0 0
  %480 = vmatpush1.bf16.msra.mxu0 0
  %481 = vmatprep.subr.bf16.mxu0 0
  %482 = vmatpush1.bf16.msra.mxu0 0
  %483 = vmatprep.subr.bf16.mxu0 0
  %484 = vmatpush1.bf16.msra.mxu0 0
  %485 = vmatprep.subr.bf16.mxu0 0
  %486 = vmatpush1.bf16.msra.mxu0 0
  %487 = vmatprep.subr.bf16.mxu0 0
  %488 = vmatpush1.bf16.msra.mxu0 0
  %489 = vmatprep.subr.bf16.mxu0 0
  %490 = vmatpush1.bf16.msra.mxu0 0
  %491 = vmatprep.subr.bf16.mxu0 0
  %492 = vmatpush1.bf16.msra.mxu0 0
  %493 = vmatprep.mubr.bf16.mxu0 0
  %494 = vmatmul.mubr.bf16.gmra.mrb[0].mxu0 %v456
  %v495 = vpop.f32.mrb[0].mxu0
  %v496 = vadd.f32 0.0, %v495
  %v497 = vpop.f32.mrb[0].mxu0
  %v498 = vpop.f32.mrb[0].mxu0
  %v499 = vpop.f32.mrb[0].mxu0
  %500 = vdwg.mxu0
  %v502 = vsel %vm93, %v406, 0
  %v505 = vsel %vm411, %v173, 0
  %507 = vmatprep.subr.bf16.mxu0 0
  %508 = vmatpush1.bf16.msra.mxu0 %v505
  %509 = vmatprep.subr.bf16.mxu0 0
  %510 = vmatpush1.bf16.msra.mxu0 0
  %511 = vmatprep.subr.bf16.mxu0 0
  %512 = vmatpush1.bf16.msra.mxu0 0
  %513 = vmatprep.subr.bf16.mxu0 0
  %514 = vmatpush1.bf16.msra.mxu0 0
  %515 = vmatprep.subr.bf16.mxu0 0
  %516 = vmatpush1.bf16.msra.mxu0 0
  %517 = vmatprep.subr.bf16.mxu0 0
  %518 = vmatpush1.bf16.msra.mxu0 0
  %519 = vmatprep.subr.bf16.mxu0 0
  %520 = vmatpush1.bf16.msra.mxu0 0
  %521 = vmatprep.subr.bf16.mxu0 0
  %522 = vmatpush1.bf16.msra.mxu0 0
  %523 = vmatprep.subr.bf16.mxu0 0
  %524 = vmatpush1.bf16.msra.mxu0 0
  %525 = vmatprep.subr.bf16.mxu0 0
  %526 = vmatpush1.bf16.msra.mxu0 0
  %527 = vmatprep.subr.bf16.mxu0 0
  %528 = vmatpush1.bf16.msra.mxu0 0
  %529 = vmatprep.subr.bf16.mxu0 0
  %530 = vmatpush1.bf16.msra.mxu0 0
  %531 = vmatprep.subr.bf16.mxu0 0
  %532 = vmatpush1.bf16.msra.mxu0 0
  %533 = vmatprep.subr.bf16.mxu0 0
  %534 = vmatpush1.bf16.msra.mxu0 0
  %535 = vmatprep.subr.bf16.mxu0 0
  %536 = vmatpush1.bf16.msra.mxu0 0
  %537 = vmatprep.subr.bf16.mxu0 0
  %538 = vmatpush1.bf16.msra.mxu0 0
  %539 = vmatprep.mubr.bf16.mxu0 0
  %540 = vmatmul.mubr.bf16.gmra.mrb[0].mxu0 %v502
  %v541 = vpop.f32.mrb[0].mxu0
  %v542 = vadd.f32 0.0, %v541
  %v543 = vpop.f32.mrb[0].mxu0
  %v544 = vpop.f32.mrb[0].mxu0
  %v545 = vpop.f32.mrb[0].mxu0
  %546 = vdwg.mxu0
  %v548 = vsel %vm93, %v407, 0
  %v551 = vsel %vm411, %v174, 0
  %553 = vmatprep.subr.bf16.mxu0 0
  %554 = vmatpush1.bf16.msra.mxu0 %v551
  %555 = vmatprep.subr.bf16.mxu0 0
  %556 = vmatpush1.bf16.msra.mxu0 0
  %557 = vmatprep.subr.bf16.mxu0 0
  %558 = vmatpush1.bf16.msra.mxu0 0
  %559 = vmatprep.subr.bf16.mxu0 0
  %560 = vmatpush1.bf16.msra.mxu0 0
  %561 = vmatprep.subr.bf16.mxu0 0
  %562 = vmatpush1.bf16.msra.mxu0 0
  %563 = vmatprep.subr.bf16.mxu0 0
  %564 = vmatpush1.bf16.msra.mxu0 0
  %565 = vmatprep.subr.bf16.mxu0 0
  %566 = vmatpush1.bf16.msra.mxu0 0
  %567 = vmatprep.subr.bf16.mxu0 0
  %568 = vmatpush1.bf16.msra.mxu0 0
  %569 = vmatprep.subr.bf16.mxu0 0
  %570 = vmatpush1.bf16.msra.mxu0 0
  %571 = vmatprep.subr.bf16.mxu0 0
  %572 = vmatpush1.bf16.msra.mxu0 0
  %573 = vmatprep.subr.bf16.mxu0 0
  %574 = vmatpush1.bf16.msra.mxu0 0
  %575 = vmatprep.subr.bf16.mxu0 0
  %576 = vmatpush1.bf16.msra.mxu0 0
  %577 = vmatprep.subr.bf16.mxu0 0
  %578 = vmatpush1.bf16.msra.mxu0 0
  %579 = vmatprep.subr.bf16.mxu0 0
  %580 = vmatpush1.bf16.msra.mxu0 0
  %581 = vmatprep.subr.bf16.mxu0 0
  %582 = vmatpush1.bf16.msra.mxu0 0
  %583 = vmatprep.subr.bf16.mxu0 0
  %584 = vmatpush1.bf16.msra.mxu0 0
  %585 = vmatprep.mubr.bf16.mxu0 0
  %586 = vmatmul.mubr.bf16.gmra.mrb[0].mxu0 %v548
  %v587 = vpop.f32.mrb[0].mxu0
  %v588 = vadd.f32 0.0, %v587
  %v589 = vpop.f32.mrb[0].mxu0
  %v590 = vpop.f32.mrb[0].mxu0
  %v591 = vpop.f32.mrb[0].mxu0
  %592 = vdwg.mxu0
  %593 = vst.msk [vmem:[#allocation3] sm:$0xff] %vm93, %v450
  %595 = vrot.lane.b32.xlu0 %v496, 8
  %v596 = vpop.permute.xlu0 %595
  %vm598 = vcmask 130112
  %599 = vst.msk [vmem:[#allocation3] sm:$0xff] %vm598, %v596
  %601 = vrot.lane.b32.xlu0 %v542, 16
  %v602 = vpop.permute.xlu0 %601
  %vm604 = vcmask 195712
  %605 = vst.msk [vmem:[#allocation3] sm:$0xff] %vm604, %v602
  %607 = vrot.lane.b32.xlu0 %v588, 24
  %v608 = vpop.permute.xlu0 %607
  %vm610 = vcmask 261312
  %611 = vst.msk [vmem:[#allocation3] sm:$0xff] %vm610, %v608
  %v612 = vld [vmem:[#allocation3] sm:$0xff]
  %v613 = vpack.c.bf16 %v612, %v612
  %v614 = vld [vmem:[%s4] sm:$0xf]
  %v615 = vld [vmem:[%s4 + $0x4] sm:$0xf]
  %v616 = vld [vmem:[%s4 + $0x8] sm:$0xf]
  %v617 = vld [vmem:[%s4 + $0xc] sm:$0xf]
  %v618 = vld [vmem:[%s5] sm:$0x1]
  %v620 = vlaneseq
  %v621 = vshrl.u32 %v620, 7
  %v622 = vsub.s32 0, %v621
  %v623 = vrot.slane %v618, %v622
  %v629 = vunpack.c.l.b16 %v614
  %v630 = vunpack.c.l.b16 %v615
  %v631 = vunpack.c.l.b16 %v616
  %v632 = vunpack.c.l.b16 %v617
  %v633 = vpack.c.b16 %v630, %v629
  %v634 = vpack.c.b16 %v632, %v631
  %v638 = vsel %vm49, %v613, 0
  %640 = vmatprep.subr.bf16.mxu0 0
  %641 = vmatpush1.bf16.msra.mxu0 %v633
  %642 = vmatprep.subr.bf16.mxu0 0
  %643 = vmatpush1.bf16.msra.mxu0 %v634
  %644 = vmatprep.subr.bf16.mxu0 0
  %645 = vmatpush1.bf16.msra.mxu0 0
  %646 = vmatprep.subr.bf16.mxu0 0
  %647 = vmatpush1.bf16.msra.mxu0 0
  %648 = vmatprep.subr.bf16.mxu0 0
  %649 = vmatpush1.bf16.msra.mxu0 0
  %650 = vmatprep.subr.bf16.mxu0 0
  %651 = vmatpush1.bf16.msra.mxu0 0
  %652 = vmatprep.subr.bf16.mxu0 0
  %653 = vmatpush1.bf16.msra.mxu0 0
  %654 = vmatprep.subr.bf16.mxu0 0
  %655 = vmatpush1.bf16.msra.mxu0 0
  %656 = vmatprep.subr.bf16.mxu0 0
  %657 = vmatpush1.bf16.msra.mxu0 0
  %658 = vmatprep.subr.bf16.mxu0 0
  %659 = vmatpush1.bf16.msra.mxu0 0
  %660 = vmatprep.subr.bf16.mxu0 0
  %661 = vmatpush1.bf16.msra.mxu0 0
  %662 = vmatprep.subr.bf16.mxu0 0
  %663 = vmatpush1.bf16.msra.mxu0 0
  %664 = vmatprep.subr.bf16.mxu0 0
  %665 = vmatpush1.bf16.msra.mxu0 0
  %666 = vmatprep.subr.bf16.mxu0 0
  %667 = vmatpush1.bf16.msra.mxu0 0
  %668 = vmatprep.subr.bf16.mxu0 0
  %669 = vmatpush1.bf16.msra.mxu0 0
  %670 = vmatprep.subr.bf16.mxu0 0
  %671 = vmatpush1.bf16.msra.mxu0 0
  %672 = vmatprep.mubr.bf16.mxu0 0
  %673 = vmatmul.mubr.bf16.gmra.mrb[0].mxu0 %v638
  %v674 = vpop.f32.mrb[0].mxu0
  %v675 = vadd.f32 %v623, %v674
  %v676 = vpop.f32.mrb[0].mxu0
  %v677 = vpop.f32.mrb[0].mxu0
  %v678 = vpop.f32.mrb[0].mxu0
  %679 = vdwg.mxu0
  %680 = vst.msk [vmem:[%s6] sm:$0xff] %vm49, %v675
  // Predicated region
  $region26: #{encoder_layer.2} parent=0 // pred_check
    _
  $region27: #{encoder_layer.2} parent=0 // pred_check_branch
    %682 = sbr.rel (0) target = $region29
  $region28: #{encoder_layer.2} parent=0 // pred_region
    _
  $region29: #{encoder_layer.2} parent=0 // pred_fallthru
    _
  // Predicated region
  $region30: #{encoder_layer.2} parent=0 // pred_check
    _
  $region31: #{encoder_layer.2} parent=0 // pred_check_branch
    %684 = sbr.rel (0) target = $region33
  $region32: #{encoder_layer.2} parent=0 // pred_region
    _
  $region33: #{encoder_layer.2} parent=0 // pred_fallthru
    _

</llo_original>
